<compile_context>
chip_gen: v7x
topology: tpu7x:2x2x1
jax: 0.10.0
libtpu: 0.0.40
codegen_flags: <defaults>
</compile_context>

<pallas_src>
import math

import jax
import jax.numpy as jnp
from jax.experimental import pallas as pl
from jax.experimental.pallas import tpu as pltpu


# ----------------------------- config (small, synthetic) -----------------------------
HIDDEN = 32
NUM_HEADS = 4
NUM_KV_HEADS = NUM_HEADS // 2
HEAD_DIM = HIDDEN // NUM_HEADS          # 8
GROUP = NUM_HEADS // NUM_KV_HEADS       # 2
KVD = NUM_KV_HEADS * HEAD_DIM           # 16
BATCH = 2
SEQ = 8
LN_EPS = 1e-12
ROPE_THETA = 10000.0


# ------------------------------------ Pallas kernel -----------------------------------
def flash_roberta_attn_kernel(
    x_ref,                # (B*S, H)   flattened hidden states
    w_ref, b_ref,         # (H, 2H+3*KVD), (1, 2H+3*KVD)  fused [Wq|Wq_rot|Wk|Wk_rot|Wv]
    cosq_ref, sinq_ref,   # (B*S, H)    RoPE tables tiled to full q width
    cosk_ref, sink_ref,   # (B*S, KVD)  RoPE tables tiled to full k width
    wo_ref, bo_ref,       # (H, H), (1, H)
    gamma_ref, beta_ref,  # (1, H) LayerNorm params
    out_ref,              # (B*S, H)
    attn_scratch,         # VMEM (B*S, H)  head-merge scratch
):
    H, d, S, B = HIDDEN, HEAD_DIM, SEQ, BATCH
    x = x_ref[...]                                                   # (B*S, H)

    # --- fused projection: one MXU matmul produces q, rot(q), k, rot(k), v ---
    proj = jnp.dot(x, w_ref[...], preferred_element_type=jnp.float32) + b_ref[...]

    # column layout of proj
    Q0, QR0 = 0, H
    K0, KR0 = 2 * H, 2 * H + KVD
    V0 = 2 * H + 2 * KVD

    # --- RoPE, full-width elementwise (rotation + 1/sqrt(d) folded into weights) ---
    q = proj[:, Q0:Q0 + H] * cosq_ref[...] + proj[:, QR0:QR0 + H] * sinq_ref[...]
    k = proj[:, K0:K0 + KVD] * cosk_ref[...] + proj[:, KR0:KR0 + KVD] * sink_ref[...]
    v = proj[:, V0:V0 + KVD]

    # --- GQA-grouped batched operands -----------------------------------------------
    # Batch axis = B * NUM_KV_HEADS; the GROUP query heads that share kv head `kvh`
    # (repeat_interleave semantics: query head h uses kv head h // GROUP) are
    # concatenated along the row axis.  Fewer, taller MXU pushes and no K/V
    # duplication.  Static slices stacked on the LEADING axis = cheap vreg placement
    # (no lane shuffles on the compute path, no reliance on >2-D transposes).
    qg = jnp.stack(
        [jnp.concatenate(
            [q[b * S:(b + 1) * S, (kvh * GROUP + g) * d:(kvh * GROUP + g + 1) * d]
             for g in range(GROUP)], axis=0)
         for b in range(B) for kvh in range(NUM_KV_HEADS)],
        axis=0)                                                       # (B*KVH, GROUP*S, d)
    kg = jnp.stack(
        [k[b * S:(b + 1) * S, kvh * d:(kvh + 1) * d]
         for b in range(B) for kvh in range(NUM_KV_HEADS)], axis=0)   # (B*KVH, S, d)
    vg = jnp.stack(
        [v[b * S:(b + 1) * S, kvh * d:(kvh + 1) * d]
         for b in range(B) for kvh in range(NUM_KV_HEADS)], axis=0)   # (B*KVH, S, d)

    # --- batched attention: 2 contractions over batch = B*KVH -----------------------
    s = jnp.einsum('gqd,gkd->gqk', qg, kg,
                   preferred_element_type=jnp.float32)                # (B*KVH, GROUP*S, S)
    s = s - jnp.max(s, axis=-1, keepdims=True)                        # row-wise, per query
    p = jnp.exp(s)
    l = jnp.sum(p, axis=-1, keepdims=True)                            # (B*KVH, GROUP*S, 1)
    og = jnp.einsum('gqk,gkd->gqd', p, vg,
                    preferred_element_type=jnp.float32)               # (B*KVH, GROUP*S, d)
    # normalize after PV (d << S at real sizes); reciprocal avoids per-score divide
    og = og * pl.reciprocal(l, approx=False)

    # --- merge heads into (B*S, H) via VMEM scratch (no lane-concat chain) ----------
    for b in range(B):
        for kvh in range(NUM_KV_HEADS):
            blk = og[b * NUM_KV_HEADS + kvh]                          # (GROUP*S, d)
            for g in range(GROUP):
                h = kvh * GROUP + g
                attn_scratch[b * S:(b + 1) * S, h * d:(h + 1) * d] = blk[g * S:(g + 1) * S, :]
    attn = attn_scratch[...]                                          # (B*S, H)

    # --- output projection + residual + LayerNorm ------------------------------------
    o = jnp.dot(attn, wo_ref[...], preferred_element_type=jnp.float32) + bo_ref[...]
    y = o + x
    mean = jnp.mean(y, axis=-1, keepdims=True)
    var = jnp.mean((y - mean) ** 2, axis=-1, keepdims=True)
    yn = (y - mean) * jax.lax.rsqrt(var + LN_EPS)
    out_ref[...] = yn * gamma_ref[...] + beta_ref[...]


# --------------------------------------- wrapper --------------------------------------
def _full_spec(shape):
    nd = len(shape)
    return pl.BlockSpec(shape, lambda i, _nd=nd: (0,) * _nd)


def flash_roberta_attention(hidden_states, kp):
    """hidden_states: (B, S, H) f32.  kp: dict of kernel-layout params."""
    B, S, H = hidden_states.shape
    x2d = hidden_states.reshape(B * S, H)          # flatten batch into sublanes

    args = (
        x2d,
        kp["w_big"], kp["b_big"],
        kp["cos_q"], kp["sin_q"],
        kp["cos_k"], kp["sin_k"],
        kp["wo"], kp["bo"],
        kp["gamma"], kp["beta"],
    )

    out2d = pl.pallas_call(
        flash_roberta_attn_kernel,
        out_shape=jax.ShapeDtypeStruct((B * S, H), jnp.float32),
        grid=(1,),                                  # whole problem in one program
        in_specs=[_full_spec(a.shape) for a in args],
        out_specs=_full_spec((B * S, H)),
        scratch_shapes=[pltpu.VMEM((B * S, H), jnp.float32)],
        compiler_params=pltpu.CompilerParams(
            dimension_semantics=("arbitrary",)),
    )(*args)
    return out2d.reshape(B, S, H)


# ------------------------------ parameter construction --------------------------------
def make_params(key):
    ks = jax.random.split(key, 10)
    scale = 0.02
    # torch-equivalent parameters stored as (in, out) / (out,)
    wq = scale * jax.random.normal(ks[0], (HIDDEN, NUM_HEADS * HEAD_DIM), jnp.float32)
    bq = scale * jax.random.normal(ks[1], (NUM_HEADS * HEAD_DIM,), jnp.float32)
    wk = scale * jax.random.normal(ks[2], (HIDDEN, KVD), jnp.float32)
    bk = scale * jax.random.normal(ks[3], (KVD,), jnp.float32)
    wv = scale * jax.random.normal(ks[4], (HIDDEN, KVD), jnp.float32)
    bv = scale * jax.random.normal(ks[5], (KVD,), jnp.float32)
    wo = scale * jax.random.normal(ks[6], (NUM_HEADS * HEAD_DIM, HIDDEN), jnp.float32)
    bo = scale * jax.random.normal(ks[7], (HIDDEN,), jnp.float32)
    gamma = jnp.ones((HIDDEN,), jnp.float32) + 0.1 * jax.random.normal(ks[8], (HIDDEN,), jnp.float32)
    beta = 0.1 * jax.random.normal(ks[9], (HIDDEN,), jnp.float32)
    return dict(wq=wq, bq=bq, wk=wk, bk=bk, wv=wv, bv=bv,
                wo=wo, bo=bo, gamma=gamma, beta=beta)


def _rotate_cols(w):
    """Return w_rot s.t. x @ w_rot == rotate_half_interleaved(x @ w) exactly.
    Works on the last axis (weight output columns or a bias vector)."""
    wp = w.reshape(*w.shape[:-1], -1, 2)
    return jnp.stack([-wp[..., 1], wp[..., 0]], axis=-1).reshape(w.shape)


def make_kernel_params(p, batch, seq):
    """Fuse [Wq|Wq_rot|Wk|Wk_rot|Wv] into one weight, fold the 1/sqrt(d) scale
    into the q columns, and precompute full-width, batch-tiled cos/sin tables."""
    d = HEAD_DIM
    inv_scale = 1.0 / math.sqrt(d)

    wq = p["wq"] * inv_scale
    bq = p["bq"] * inv_scale
    wq_r, bq_r = _rotate_cols(wq), _rotate_cols(bq)       # rotation commutes with scaling
    wk, bk = p["wk"], p["bk"]
    wk_r, bk_r = _rotate_cols(wk), _rotate_cols(bk)

    w_big = jnp.concatenate([wq, wq_r, wk, wk_r, p["wv"]], axis=1)   # (H, 2H+3*KVD)
    b_big = jnp.concatenate([bq, bq_r, bk, bk_r, p["bv"]], axis=0)[None, :]

    # interleaved (lucidrains-style) RoPE tables, tiled across heads and batch rows
    inv_freq = 1.0 / (ROPE_THETA ** (jnp.arange(0, d, 2, dtype=jnp.float32) / d))
    t = jnp.arange(seq, dtype=jnp.float32)
    freqs = jnp.einsum("s,f->sf", t, inv_freq)            # (S, d//2)
    emb = jnp.repeat(freqs, 2, axis=-1)                   # (S, d)
    cos_d, sin_d = jnp.cos(emb), jnp.sin(emb)
    cos_q = jnp.tile(cos_d, (batch, NUM_HEADS))           # (B*S, H)
    sin_q = jnp.tile(sin_d, (batch, NUM_HEADS))
    cos_k = jnp.tile(cos_d, (batch, NUM_KV_HEADS))        # (B*S, KVD)
    sin_k = jnp.tile(sin_d, (batch, NUM_KV_HEADS))

    return dict(
        w_big=w_big, b_big=b_big,
        cos_q=cos_q, sin_q=sin_q, cos_k=cos_k, sin_k=sin_k,
        wo=p["wo"], bo=p["bo"][None, :],
        gamma=p["gamma"][None, :], beta=p["beta"][None, :],
    )


# ----------------------------- pure-JAX reference (for check) -------------------------
def reference(x, p):
    B, S, H = x.shape
    d = HEAD_DIM
    q = (x @ p["wq"] + p["bq"]).reshape(B, S, NUM_HEADS, d)
    k = (x @ p["wk"] + p["bk"]).reshape(B, S, NUM_KV_HEADS, d)
    v = (x @ p["wv"] + p["bv"]).reshape(B, S, NUM_KV_HEADS, d)

    inv_freq = 1.0 / (ROPE_THETA ** (jnp.arange(0, d, 2, dtype=jnp.float32) / d))
    t = jnp.arange(S, dtype=jnp.float32)
    freqs = jnp.einsum("s,f->sf", t, inv_freq)
    emb = jnp.repeat(freqs, 2, axis=-1)                   # interleaved duplication
    cos_i = jnp.cos(emb)[None, :, None, :]
    sin_i = jnp.sin(emb)[None, :, None, :]

    def rot_half_interleaved(u):
        u2 = u.reshape(*u.shape[:-1], d // 2, 2)
        return jnp.stack([-u2[..., 1], u2[..., 0]], axis=-1).reshape(u.shape)

    q = q * cos_i + rot_half_interleaved(q) * sin_i
    k = k * cos_i + rot_half_interleaved(k) * sin_i

    k = jnp.repeat(k, GROUP, axis=2)                      # repeat_interleave over heads
    v = jnp.repeat(v, GROUP, axis=2)

    q = q.transpose(0, 2, 1, 3)
    k = k.transpose(0, 2, 1, 3)
    v = v.transpose(0, 2, 1, 3)

    s = jnp.einsum("bhqd,bhkd->bhqk", q, k) / math.sqrt(d)
    pattn = jax.nn.softmax(s, axis=-1)
    o = jnp.einsum("bhqk,bhkd->bhqd", pattn, v)
    o = o.transpose(0, 2, 1, 3).reshape(B, S, H)
    o = o @ p["wo"] + p["bo"]
    y = o + x
    mean = jnp.mean(y, axis=-1, keepdims=True)
    var = jnp.mean((y - mean) ** 2, axis=-1, keepdims=True)
    return (y - mean) * jax.lax.rsqrt(var + LN_EPS) * p["gamma"] + p["beta"]


# ----------------------------------------- main ----------------------------------------
if __name__ == "__main__":
    key = jax.random.PRNGKey(0)
    k_x, k_p = jax.random.split(key)

    hidden_states = jax.random.normal(k_x, (BATCH, SEQ, HIDDEN), jnp.float32)
    torch_params = make_params(k_p)
    kernel_params = make_kernel_params(torch_params, BATCH, SEQ)

    out = flash_roberta_attention(hidden_states, kernel_params)
    out = jax.block_until_ready(out)

    ref = reference(hidden_states, torch_params)
    assert out.shape == (BATCH, SEQ, HIDDEN)
    assert jnp.allclose(out, ref, atol=2e-4, rtol=2e-4), (
        f"max abs err = {jnp.max(jnp.abs(out - ref))}")

    print("KERNEL_OK")
</pallas_src>

<mosaic_0001>
module attributes {stable_mosaic.version = 11 : i64} {
  func.func @flash_roberta_attn_kernel(%arg0: i32, %arg1: memref<16x32xf32, #tpu.memory_space<vmem>>, %arg2: memref<32x112xf32, #tpu.memory_space<vmem>>, %arg3: memref<1x112xf32, #tpu.memory_space<vmem>>, %arg4: memref<16x32xf32, #tpu.memory_space<vmem>>, %arg5: memref<16x32xf32, #tpu.memory_space<vmem>>, %arg6: memref<16x16xf32, #tpu.memory_space<vmem>>, %arg7: memref<16x16xf32, #tpu.memory_space<vmem>>, %arg8: memref<32x32xf32, #tpu.memory_space<vmem>>, %arg9: memref<1x32xf32, #tpu.memory_space<vmem>>, %arg10: memref<1x32xf32, #tpu.memory_space<vmem>>, %arg11: memref<1x32xf32, #tpu.memory_space<vmem>>, %arg12: memref<16x32xf32, #tpu.memory_space<vmem>>, %arg13: memref<16x32xf32, #tpu.memory_space<vmem>>) attributes {dimension_semantics = [#tpu.dimension_semantics<arbitrary>], iteration_bounds = array<i64: 1>, scalar_prefetch = 0 : i64, scratch_operands = 1 : i64, tpu.core_type = #tpu.core_type<tc>, window_params = [{pipeline_mode = #tpu.pipeline_mode<synchronous>, transform_indices = @transform_0, window_bounds = array<i64: 16, 32>}, {pipeline_mode = #tpu.pipeline_mode<synchronous>, transform_indices = @transform_1, window_bounds = array<i64: 32, 112>}, {pipeline_mode = #tpu.pipeline_mode<synchronous>, transform_indices = @transform_2, window_bounds = array<i64: 1, 112>}, {pipeline_mode = #tpu.pipeline_mode<synchronous>, transform_indices = @transform_3, window_bounds = array<i64: 16, 32>}, {pipeline_mode = #tpu.pipeline_mode<synchronous>, transform_indices = @transform_4, window_bounds = array<i64: 16, 32>}, {pipeline_mode = #tpu.pipeline_mode<synchronous>, transform_indices = @transform_5, window_bounds = array<i64: 16, 16>}, {pipeline_mode = #tpu.pipeline_mode<synchronous>, transform_indices = @transform_6, window_bounds = array<i64: 16, 16>}, {pipeline_mode = #tpu.pipeline_mode<synchronous>, transform_indices = @transform_7, window_bounds = array<i64: 32, 32>}, {pipeline_mode = #tpu.pipeline_mode<synchronous>, transform_indices = @transform_8, window_bounds = array<i64: 1, 32>}, {pipeline_mode = #tpu.pipeline_mode<synchronous>, transform_indices = @transform_9, window_bounds = array<i64: 1, 32>}, {pipeline_mode = #tpu.pipeline_mode<synchronous>, transform_indices = @transform_10, window_bounds = array<i64: 1, 32>}, {pipeline_mode = #tpu.pipeline_mode<synchronous>, transform_indices = @transform_11, window_bounds = array<i64: 16, 32>}]} {
    %c0 = arith.constant 0 : index
    %c0_0 = arith.constant 0 : index
    %0 = vector.load %arg1[%c0, %c0_0] : memref<16x32xf32, #tpu.memory_space<vmem>>, vector<16x32xf32>
    %c0_1 = arith.constant 0 : index
    %c0_2 = arith.constant 0 : index
    %1 = vector.load %arg2[%c0_1, %c0_2] : memref<32x112xf32, #tpu.memory_space<vmem>>, vector<32x112xf32>
    %cst = arith.constant dense<0.000000e+00> : vector<16x112xf32>
    %2 = tpu.matmul %0, %1, %cst {dimension_numbers = #tpu.dot_dimension_numbers<[1], [0], [0], [1], [0, 0, 1, 1], [], []>} : vector<16x32xf32>, vector<32x112xf32>, vector<16x112xf32> -> vector<16x112xf32>
    %c0_3 = arith.constant 0 : index
    %c0_4 = arith.constant 0 : index
    %3 = vector.load %arg3[%c0_3, %c0_4] : memref<1x112xf32, #tpu.memory_space<vmem>>, vector<1x112xf32>
    %4 = vector.broadcast %3 : vector<1x112xf32> to vector<16x112xf32>
    %5 = arith.addf %2, %4 : vector<16x112xf32>
    %6 = vector.extract_strided_slice %5 {offsets = [0, 0], sizes = [16, 32], strides = [1, 1]} : vector<16x112xf32> to vector<16x32xf32>
    %c0_5 = arith.constant 0 : index
    %c0_6 = arith.constant 0 : index
    %7 = vector.load %arg4[%c0_5, %c0_6] : memref<16x32xf32, #tpu.memory_space<vmem>>, vector<16x32xf32>
    %8 = arith.mulf %6, %7 : vector<16x32xf32>
    %9 = vector.extract_strided_slice %5 {offsets = [0, 32], sizes = [16, 32], strides = [1, 1]} : vector<16x112xf32> to vector<16x32xf32>
    %c0_7 = arith.constant 0 : index
    %c0_8 = arith.constant 0 : index
    %10 = vector.load %arg5[%c0_7, %c0_8] : memref<16x32xf32, #tpu.memory_space<vmem>>, vector<16x32xf32>
    %11 = arith.mulf %9, %10 : vector<16x32xf32>
    %12 = arith.addf %8, %11 : vector<16x32xf32>
    %13 = vector.extract_strided_slice %5 {offsets = [0, 64], sizes = [16, 16], strides = [1, 1]} : vector<16x112xf32> to vector<16x16xf32>
    %c0_9 = arith.constant 0 : index
    %c0_10 = arith.constant 0 : index
    %14 = vector.load %arg6[%c0_9, %c0_10] : memref<16x16xf32, #tpu.memory_space<vmem>>, vector<16x16xf32>
    %15 = arith.mulf %13, %14 : vector<16x16xf32>
    %16 = vector.extract_strided_slice %5 {offsets = [0, 80], sizes = [16, 16], strides = [1, 1]} : vector<16x112xf32> to vector<16x16xf32>
    %c0_11 = arith.constant 0 : index
    %c0_12 = arith.constant 0 : index
    %17 = vector.load %arg7[%c0_11, %c0_12] : memref<16x16xf32, #tpu.memory_space<vmem>>, vector<16x16xf32>
    %18 = arith.mulf %16, %17 : vector<16x16xf32>
    %19 = arith.addf %15, %18 : vector<16x16xf32>
    %20 = vector.extract_strided_slice %5 {offsets = [0, 96], sizes = [16, 16], strides = [1, 1]} : vector<16x112xf32> to vector<16x16xf32>
    %21 = vector.extract_strided_slice %12 {offsets = [0, 0], sizes = [8, 8], strides = [1, 1]} : vector<16x32xf32> to vector<8x8xf32>
    %22 = vector.extract_strided_slice %12 {offsets = [0, 8], sizes = [8, 8], strides = [1, 1]} : vector<16x32xf32> to vector<8x8xf32>
    %23 = tpu.concatenate %21, %22 in 0 : vector<8x8xf32>, vector<8x8xf32> -> vector<16x8xf32>
    %24 = vector.extract_strided_slice %12 {offsets = [0, 16], sizes = [8, 8], strides = [1, 1]} : vector<16x32xf32> to vector<8x8xf32>
    %25 = vector.extract_strided_slice %12 {offsets = [0, 24], sizes = [8, 8], strides = [1, 1]} : vector<16x32xf32> to vector<8x8xf32>
    %26 = tpu.concatenate %24, %25 in 0 : vector<8x8xf32>, vector<8x8xf32> -> vector<16x8xf32>
    %27 = vector.extract_strided_slice %12 {offsets = [8, 0], sizes = [8, 8], strides = [1, 1]} : vector<16x32xf32> to vector<8x8xf32>
    %28 = vector.extract_strided_slice %12 {offsets = [8, 8], sizes = [8, 8], strides = [1, 1]} : vector<16x32xf32> to vector<8x8xf32>
    %29 = tpu.concatenate %27, %28 in 0 : vector<8x8xf32>, vector<8x8xf32> -> vector<16x8xf32>
    %30 = vector.extract_strided_slice %12 {offsets = [8, 16], sizes = [8, 8], strides = [1, 1]} : vector<16x32xf32> to vector<8x8xf32>
    %31 = vector.extract_strided_slice %12 {offsets = [8, 24], sizes = [8, 8], strides = [1, 1]} : vector<16x32xf32> to vector<8x8xf32>
    %32 = tpu.concatenate %30, %31 in 0 : vector<8x8xf32>, vector<8x8xf32> -> vector<16x8xf32>
    %33 = vector.shape_cast %23 : vector<16x8xf32> to vector<1x16x8xf32>
    %34 = vector.shape_cast %26 : vector<16x8xf32> to vector<1x16x8xf32>
    %35 = vector.shape_cast %29 : vector<16x8xf32> to vector<1x16x8xf32>
    %36 = vector.shape_cast %32 : vector<16x8xf32> to vector<1x16x8xf32>
    %37 = tpu.concatenate %33, %34, %35, %36 in 0 : vector<1x16x8xf32>, vector<1x16x8xf32>, vector<1x16x8xf32>, vector<1x16x8xf32> -> vector<4x16x8xf32>
    %38 = vector.extract_strided_slice %19 {offsets = [0, 0], sizes = [8, 8], strides = [1, 1]} : vector<16x16xf32> to vector<8x8xf32>
    %39 = vector.extract_strided_slice %19 {offsets = [0, 8], sizes = [8, 8], strides = [1, 1]} : vector<16x16xf32> to vector<8x8xf32>
    %40 = vector.extract_strided_slice %19 {offsets = [8, 0], sizes = [8, 8], strides = [1, 1]} : vector<16x16xf32> to vector<8x8xf32>
    %41 = vector.extract_strided_slice %19 {offsets = [8, 8], sizes = [8, 8], strides = [1, 1]} : vector<16x16xf32> to vector<8x8xf32>
    %42 = vector.shape_cast %38 : vector<8x8xf32> to vector<1x8x8xf32>
    %43 = vector.shape_cast %39 : vector<8x8xf32> to vector<1x8x8xf32>
    %44 = vector.shape_cast %40 : vector<8x8xf32> to vector<1x8x8xf32>
    %45 = vector.shape_cast %41 : vector<8x8xf32> to vector<1x8x8xf32>
    %46 = tpu.concatenate %42, %43, %44, %45 in 0 : vector<1x8x8xf32>, vector<1x8x8xf32>, vector<1x8x8xf32>, vector<1x8x8xf32> -> vector<4x8x8xf32>
    %47 = vector.extract_strided_slice %20 {offsets = [0, 0], sizes = [8, 8], strides = [1, 1]} : vector<16x16xf32> to vector<8x8xf32>
    %48 = vector.extract_strided_slice %20 {offsets = [0, 8], sizes = [8, 8], strides = [1, 1]} : vector<16x16xf32> to vector<8x8xf32>
    %49 = vector.extract_strided_slice %20 {offsets = [8, 0], sizes = [8, 8], strides = [1, 1]} : vector<16x16xf32> to vector<8x8xf32>
    %50 = vector.extract_strided_slice %20 {offsets = [8, 8], sizes = [8, 8], strides = [1, 1]} : vector<16x16xf32> to vector<8x8xf32>
    %51 = vector.shape_cast %47 : vector<8x8xf32> to vector<1x8x8xf32>
    %52 = vector.shape_cast %48 : vector<8x8xf32> to vector<1x8x8xf32>
    %53 = vector.shape_cast %49 : vector<8x8xf32> to vector<1x8x8xf32>
    %54 = vector.shape_cast %50 : vector<8x8xf32> to vector<1x8x8xf32>
    %55 = tpu.concatenate %51, %52, %53, %54 in 0 : vector<1x8x8xf32>, vector<1x8x8xf32>, vector<1x8x8xf32>, vector<1x8x8xf32> -> vector<4x8x8xf32>
    "tpu.trace_start"() <{level = 10 : i32, message = "gqd,gkd->gqk"}> : () -> ()
    %cst_13 = arith.constant dense<0.000000e+00> : vector<4x16x8xf32>
    %56 = tpu.matmul %37, %46, %cst_13 {dimension_numbers = #tpu.dot_dimension_numbers<[2], [2], [1], [1], [0, 0, 0, 1, 1, 1], [0], [0]>} : vector<4x16x8xf32>, vector<4x8x8xf32>, vector<4x16x8xf32> -> vector<4x16x8xf32>
    "tpu.trace_stop"() : () -> ()
    %cst_14 = arith.constant dense<0xFF800000> : vector<4x16xf32>
    %57 = vector.multi_reduction <maximumf>, %56, %cst_14 [2] : vector<4x16x8xf32> to vector<4x16xf32>
    %58 = vector.shape_cast %57 : vector<4x16xf32> to vector<4x16x1xf32>
    %59 = vector.broadcast %58 : vector<4x16x1xf32> to vector<4x16x8xf32>
    %60 = arith.subf %56, %59 : vector<4x16x8xf32>
    %61 = math.exp %60 : vector<4x16x8xf32>
    %cst_15 = arith.constant dense<0.000000e+00> : vector<4x16xf32>
    %62 = vector.multi_reduction <add>, %61, %cst_15 [2] : vector<4x16x8xf32> to vector<4x16xf32>
    %63 = vector.shape_cast %62 : vector<4x16xf32> to vector<4x16x1xf32>
    "tpu.trace_start"() <{level = 10 : i32, message = "gqk,gkd->gqd"}> : () -> ()
    %cst_16 = arith.constant dense<0.000000e+00> : vector<4x16x8xf32>
    %64 = tpu.matmul %61, %55, %cst_16 {dimension_numbers = #tpu.dot_dimension_numbers<[2], [1], [1], [2], [0, 0, 0, 1, 1, 2], [0], [0]>} : vector<4x16x8xf32>, vector<4x8x8xf32>, vector<4x16x8xf32> -> vector<4x16x8xf32>
    "tpu.trace_stop"() : () -> ()
    %65 = tpu.reciprocal %63 : vector<4x16x1xf32> -> vector<4x16x1xf32>
    %66 = vector.broadcast %65 : vector<4x16x1xf32> to vector<4x16x8xf32>
    %67 = arith.mulf %64, %66 : vector<4x16x8xf32>
    %68 = vector.extract_strided_slice %67 {offsets = [0, 0, 0], sizes = [1, 16, 8], strides = [1, 1, 1]} : vector<4x16x8xf32> to vector<1x16x8xf32>
    %69 = vector.shape_cast %68 : vector<1x16x8xf32> to vector<16x8xf32>
    %70 = vector.extract_strided_slice %69 {offsets = [0, 0], sizes = [8, 8], strides = [1, 1]} : vector<16x8xf32> to vector<8x8xf32>
    %c0_17 = arith.constant 0 : index
    %c0_18 = arith.constant 0 : index
    %71 = vector.load %arg13[%c0_17, %c0_18] : memref<16x32xf32, #tpu.memory_space<vmem>>, vector<8x8xf32>
    tpu.vector_store %arg13[%c0_17, %c0_18], %70 {strides = array<i32>} : memref<16x32xf32, #tpu.memory_space<vmem>>, vector<8x8xf32>,
    %72 = vector.extract_strided_slice %69 {offsets = [8, 0], sizes = [8, 8], strides = [1, 1]} : vector<16x8xf32> to vector<8x8xf32>
    %c0_19 = arith.constant 0 : index
    %c8 = arith.constant 8 : index
    %73 = vector.load %arg13[%c0_19, %c8] : memref<16x32xf32, #tpu.memory_space<vmem>>, vector<8x8xf32>
    tpu.vector_store %arg13[%c0_19, %c8], %72 {strides = array<i32>} : memref<16x32xf32, #tpu.memory_space<vmem>>, vector<8x8xf32>,
    %74 = vector.extract_strided_slice %67 {offsets = [1, 0, 0], sizes = [1, 16, 8], strides = [1, 1, 1]} : vector<4x16x8xf32> to vector<1x16x8xf32>
    %75 = vector.shape_cast %74 : vector<1x16x8xf32> to vector<16x8xf32>
    %76 = vector.extract_strided_slice %75 {offsets = [0, 0], sizes = [8, 8], strides = [1, 1]} : vector<16x8xf32> to vector<8x8xf32>
    %c0_20 = arith.constant 0 : index
    %c16 = arith.constant 16 : index
    %77 = vector.load %arg13[%c0_20, %c16] : memref<16x32xf32, #tpu.memory_space<vmem>>, vector<8x8xf32>
    tpu.vector_store %arg13[%c0_20, %c16], %76 {strides = array<i32>} : memref<16x32xf32, #tpu.memory_space<vmem>>, vector<8x8xf32>,
    %78 = vector.extract_strided_slice %75 {offsets = [8, 0], sizes = [8, 8], strides = [1, 1]} : vector<16x8xf32> to vector<8x8xf32>
    %c0_21 = arith.constant 0 : index
    %c24 = arith.constant 24 : index
    %79 = vector.load %arg13[%c0_21, %c24] : memref<16x32xf32, #tpu.memory_space<vmem>>, vector<8x8xf32>
    tpu.vector_store %arg13[%c0_21, %c24], %78 {strides = array<i32>} : memref<16x32xf32, #tpu.memory_space<vmem>>, vector<8x8xf32>,
    %80 = vector.extract_strided_slice %67 {offsets = [2, 0, 0], sizes = [1, 16, 8], strides = [1, 1, 1]} : vector<4x16x8xf32> to vector<1x16x8xf32>
    %81 = vector.shape_cast %80 : vector<1x16x8xf32> to vector<16x8xf32>
    %82 = vector.extract_strided_slice %81 {offsets = [0, 0], sizes = [8, 8], strides = [1, 1]} : vector<16x8xf32> to vector<8x8xf32>
    %c8_22 = arith.constant 8 : index
    %c0_23 = arith.constant 0 : index
    %83 = vector.load %arg13[%c8_22, %c0_23] : memref<16x32xf32, #tpu.memory_space<vmem>>, vector<8x8xf32>
    tpu.vector_store %arg13[%c8_22, %c0_23], %82 {strides = array<i32>} : memref<16x32xf32, #tpu.memory_space<vmem>>, vector<8x8xf32>,
    %84 = vector.extract_strided_slice %81 {offsets = [8, 0], sizes = [8, 8], strides = [1, 1]} : vector<16x8xf32> to vector<8x8xf32>
    %c8_24 = arith.constant 8 : index
    %c8_25 = arith.constant 8 : index
    %85 = vector.load %arg13[%c8_24, %c8_25] : memref<16x32xf32, #tpu.memory_space<vmem>>, vector<8x8xf32>
    tpu.vector_store %arg13[%c8_24, %c8_25], %84 {strides = array<i32>} : memref<16x32xf32, #tpu.memory_space<vmem>>, vector<8x8xf32>,
    %86 = vector.extract_strided_slice %67 {offsets = [3, 0, 0], sizes = [1, 16, 8], strides = [1, 1, 1]} : vector<4x16x8xf32> to vector<1x16x8xf32>
    %87 = vector.shape_cast %86 : vector<1x16x8xf32> to vector<16x8xf32>
    %88 = vector.extract_strided_slice %87 {offsets = [0, 0], sizes = [8, 8], strides = [1, 1]} : vector<16x8xf32> to vector<8x8xf32>
    %c8_26 = arith.constant 8 : index
    %c16_27 = arith.constant 16 : index
    %89 = vector.load %arg13[%c8_26, %c16_27] : memref<16x32xf32, #tpu.memory_space<vmem>>, vector<8x8xf32>
    tpu.vector_store %arg13[%c8_26, %c16_27], %88 {strides = array<i32>} : memref<16x32xf32, #tpu.memory_space<vmem>>, vector<8x8xf32>,
    %90 = vector.extract_strided_slice %87 {offsets = [8, 0], sizes = [8, 8], strides = [1, 1]} : vector<16x8xf32> to vector<8x8xf32>
    %c8_28 = arith.constant 8 : index
    %c24_29 = arith.constant 24 : index
    %91 = vector.load %arg13[%c8_28, %c24_29] : memref<16x32xf32, #tpu.memory_space<vmem>>, vector<8x8xf32>
    tpu.vector_store %arg13[%c8_28, %c24_29], %90 {strides = array<i32>} : memref<16x32xf32, #tpu.memory_space<vmem>>, vector<8x8xf32>,
    %c0_30 = arith.constant 0 : index
    %c0_31 = arith.constant 0 : index
    %92 = vector.load %arg13[%c0_30, %c0_31] : memref<16x32xf32, #tpu.memory_space<vmem>>, vector<16x32xf32>
    %c0_32 = arith.constant 0 : index
    %c0_33 = arith.constant 0 : index
    %93 = vector.load %arg8[%c0_32, %c0_33] : memref<32x32xf32, #tpu.memory_space<vmem>>, vector<32x32xf32>
    %cst_34 = arith.constant dense<0.000000e+00> : vector<16x32xf32>
    %94 = tpu.matmul %92, %93, %cst_34 {dimension_numbers = #tpu.dot_dimension_numbers<[1], [0], [0], [1], [0, 0, 1, 1], [], []>} : vector<16x32xf32>, vector<32x32xf32>, vector<16x32xf32> -> vector<16x32xf32>
    %c0_35 = arith.constant 0 : index
    %c0_36 = arith.constant 0 : index
    %95 = vector.load %arg9[%c0_35, %c0_36] : memref<1x32xf32, #tpu.memory_space<vmem>>, vector<1x32xf32>
    %96 = vector.broadcast %95 : vector<1x32xf32> to vector<16x32xf32>
    %97 = arith.addf %94, %96 : vector<16x32xf32>
    %98 = arith.addf %97, %0 : vector<16x32xf32>
    %cst_37 = arith.constant dense<0.000000e+00> : vector<16xf32>
    %99 = vector.multi_reduction <add>, %98, %cst_37 [1] : vector<16x32xf32> to vector<16xf32>
    %100 = vector.shape_cast %99 : vector<16xf32> to vector<16x1xf32>
    %cst_38 = arith.constant 3.200000e+01 : f32
    %101 = vector.broadcast %cst_38 : f32 to vector<16x1xf32>
    %102 = arith.divf %100, %101 : vector<16x1xf32>
    %103 = vector.broadcast %102 : vector<16x1xf32> to vector<16x32xf32>
    %104 = arith.subf %98, %103 : vector<16x32xf32>
    %105 = arith.mulf %104, %104 : vector<16x32xf32>
    %cst_39 = arith.constant dense<0.000000e+00> : vector<16xf32>
    %106 = vector.multi_reduction <add>, %105, %cst_39 [1] : vector<16x32xf32> to vector<16xf32>
    %107 = vector.shape_cast %106 : vector<16xf32> to vector<16x1xf32>
    %cst_40 = arith.constant 3.200000e+01 : f32
    %108 = vector.broadcast %cst_40 : f32 to vector<16x1xf32>
    %109 = arith.divf %107, %108 : vector<16x1xf32>
    %110 = vector.broadcast %102 : vector<16x1xf32> to vector<16x32xf32>
    %111 = arith.subf %98, %110 : vector<16x32xf32>
    %cst_41 = arith.constant 9.99999996E-13 : f32
    %112 = vector.broadcast %cst_41 : f32 to vector<16x1xf32>
    %113 = arith.addf %109, %112 : vector<16x1xf32>
    %114 = math.rsqrt %113 : vector<16x1xf32>
    %115 = vector.broadcast %114 : vector<16x1xf32> to vector<16x32xf32>
    %116 = arith.mulf %111, %115 : vector<16x32xf32>
    %c0_42 = arith.constant 0 : index
    %c0_43 = arith.constant 0 : index
    %117 = vector.load %arg10[%c0_42, %c0_43] : memref<1x32xf32, #tpu.memory_space<vmem>>, vector<1x32xf32>
    %118 = vector.broadcast %117 : vector<1x32xf32> to vector<16x32xf32>
    %119 = arith.mulf %116, %118 : vector<16x32xf32>
    %c0_44 = arith.constant 0 : index
    %c0_45 = arith.constant 0 : index
    %120 = vector.load %arg11[%c0_44, %c0_45] : memref<1x32xf32, #tpu.memory_space<vmem>>, vector<1x32xf32>
    %121 = vector.broadcast %120 : vector<1x32xf32> to vector<16x32xf32>
    %122 = arith.addf %119, %121 : vector<16x32xf32>
    %c0_46 = arith.constant 0 : index
    %c0_47 = arith.constant 0 : index
    %123 = vector.load %arg12[%c0_46, %c0_47] : memref<16x32xf32, #tpu.memory_space<vmem>>, vector<16x32xf32>
    tpu.vector_store %arg12[%c0_46, %c0_47], %122 {strides = array<i32>} : memref<16x32xf32, #tpu.memory_space<vmem>>, vector<16x32xf32>,
    return
  }
  func.func @transform_0(%arg0: i32) -> (i32, i32) {
    %c0_i32 = arith.constant 0 : i32
    %c0_i32_0 = arith.constant 0 : i32
    %c0_i32_1 = arith.constant 0 : i32
    return %c0_i32, %c0_i32_0 : i32, i32
  }
  func.func @transform_1(%arg0: i32) -> (i32, i32) {
    %c0_i32 = arith.constant 0 : i32
    %c0_i32_0 = arith.constant 0 : i32
    %c0_i32_1 = arith.constant 0 : i32
    return %c0_i32, %c0_i32_0 : i32, i32
  }
  func.func @transform_2(%arg0: i32) -> (i32, i32) {
    %c0_i32 = arith.constant 0 : i32
    %c0_i32_0 = arith.constant 0 : i32
    %c0_i32_1 = arith.constant 0 : i32
    return %c0_i32, %c0_i32_0 : i32, i32
  }
  func.func @transform_3(%arg0: i32) -> (i32, i32) {
    %c0_i32 = arith.constant 0 : i32
    %c0_i32_0 = arith.constant 0 : i32
    %c0_i32_1 = arith.constant 0 : i32
    return %c0_i32, %c0_i32_0 : i32, i32
  }
  func.func @transform_4(%arg0: i32) -> (i32, i32) {
    %c0_i32 = arith.constant 0 : i32
    %c0_i32_0 = arith.constant 0 : i32
    %c0_i32_1 = arith.constant 0 : i32
    return %c0_i32, %c0_i32_0 : i32, i32
  }
  func.func @transform_5(%arg0: i32) -> (i32, i32) {
    %c0_i32 = arith.constant 0 : i32
    %c0_i32_0 = arith.constant 0 : i32
    %c0_i32_1 = arith.constant 0 : i32
    return %c0_i32, %c0_i32_0 : i32, i32
  }
  func.func @transform_6(%arg0: i32) -> (i32, i32) {
    %c0_i32 = arith.constant 0 : i32
    %c0_i32_0 = arith.constant 0 : i32
    %c0_i32_1 = arith.constant 0 : i32
    return %c0_i32, %c0_i32_0 : i32, i32
  }
  func.func @transform_7(%arg0: i32) -> (i32, i32) {
    %c0_i32 = arith.constant 0 : i32
    %c0_i32_0 = arith.constant 0 : i32
    %c0_i32_1 = arith.constant 0 : i32
    return %c0_i32, %c0_i32_0 : i32, i32
  }
  func.func @transform_8(%arg0: i32) -> (i32, i32) {
    %c0_i32 = arith.constant 0 : i32
    %c0_i32_0 = arith.constant 0 : i32
    %c0_i32_1 = arith.constant 0 : i32
    return %c0_i32, %c0_i32_0 : i32, i32
  }
  func.func @transform_9(%arg0: i32) -> (i32, i32) {
    %c0_i32 = arith.constant 0 : i32
    %c0_i32_0 = arith.constant 0 : i32
    %c0_i32_1 = arith.constant 0 : i32
    return %c0_i32, %c0_i32_0 : i32, i32
  }
  func.func @transform_10(%arg0: i32) -> (i32, i32) {
    %c0_i32 = arith.constant 0 : i32
    %c0_i32_0 = arith.constant 0 : i32
    %c0_i32_1 = arith.constant 0 : i32
    return %c0_i32, %c0_i32_0 : i32, i32
  }
  func.func @transform_11(%arg0: i32) -> (i32, i32) {
    %c0_i32 = arith.constant 0 : i32
    %c0_i32_0 = arith.constant 0 : i32
    %c0_i32_1 = arith.constant 0 : i32
    return %c0_i32, %c0_i32_0 : i32, i32
  }
}

</mosaic_0001>

<llo_original>
// kernel: tpu_custom_call.1
$region0: #{tpu_custom_call.1}
  #allocation0 [shape = 'u32[]', space=smem, size = 0x4, offset = 0x4, fixed_abs, tag = 'smem constant byte address 0x4 - core index']
  #allocation1 [shape = 'u32[144,128]{1,0:T(1,128)}', space=vmem, size = 0x12000, scoped, tag = 'internal scratch']
  #allocation2 [shape = 'f32[16,32]{1,0:T(8,128)}', space=vmem, size = 0x2000, scoped, tag = 'scratch operand']
  %s0 = inlined_call_operand.hbm [shape: f32[16,32], index: 0, kind: input, shape index: {}]
  %s1 = inlined_call_operand.hbm [shape: f32[32,112], index: 1, kind: input, shape index: {}]
  %s2 = inlined_call_operand.vmem [shape: f32[1,112], index: 2, kind: input, shape index: {}]
  %s3 = inlined_call_operand.hbm [shape: f32[16,32], index: 3, kind: input, shape index: {}]
  %s4 = inlined_call_operand.hbm [shape: f32[16,32], index: 4, kind: input, shape index: {}]
  %s5 = inlined_call_operand.vmem [shape: f32[16,16], index: 5, kind: input, shape index: {}]
  %s6 = inlined_call_operand.hbm [shape: f32[16,16], index: 6, kind: input, shape index: {}]
  %s7 = inlined_call_operand.hbm [shape: f32[32,32], index: 7, kind: input, shape index: {}]
  %s8 = inlined_call_operand.vmem [shape: f32[1,32], index: 8, kind: input, shape index: {}]
  %s9 = inlined_call_operand.vmem [shape: f32[1,32], index: 9, kind: input, shape index: {}]
  %s10 = inlined_call_operand.vmem [shape: f32[1,32], index: 10, kind: input, shape index: {}]
  %s11 = inlined_call_operand.hbm [shape: f32[16,32], index: 11, kind: output, shape index: {}]
  %s12 = sld [smem:[#allocation0]]
  $region78: #{tpu_custom_call.1} parent=0
    _
  %s14 = ssub.s32 1, %s12
  %s15 = scalar_select 0, %s14, %s12
  $region1: #{tpu_custom_call.1} parent=0
    #allocation3 [shape = 'u8[8192]{0}', space=vmem, size = 0x2000, scoped, tag = 'input window, operand 0, single buffered']
    #allocation4 [shape = 's32[1]{0}', space=sflag, size = 0x4, scoped, tag = 'scoped memory for tpu_custom_call.1']
    #allocation5 [shape = 's32[1]{0}', space=sflag, size = 0x4, scoped, tag = 'scoped memory for tpu_custom_call.1']
    #allocation6 [shape = 'u8[16384]{0}', space=vmem, size = 0x4000, scoped, tag = 'input window, operand 1, single buffered']
    #allocation7 [shape = 's32[1]{0}', space=sflag, size = 0x4, scoped, tag = 'scoped memory for tpu_custom_call.1']
    #allocation8 [shape = 'u8[8192]{0}', space=vmem, size = 0x2000, scoped, tag = 'input window, operand 3, single buffered']
    #allocation9 [shape = 'u8[8192]{0}', space=vmem, size = 0x2000, scoped, tag = 'input window, operand 4, single buffered']
    #allocation10 [shape = 's32[1]{0}', space=sflag, size = 0x4, scoped, tag = 'scoped memory for tpu_custom_call.1']
    #allocation11 [shape = 'u8[8192]{0}', space=vmem, size = 0x2000, scoped, tag = 'input window, operand 6, single buffered']
    #allocation12 [shape = 'u8[16384]{0}', space=vmem, size = 0x4000, scoped, tag = 'input window, operand 7, single buffered']
    #allocation13 [shape = 's32[1]{0}', space=sflag, size = 0x4, scoped, tag = 'scoped memory for tpu_custom_call.1']
    #allocation14 [shape = 'u8[8192]{0}', space=vmem, size = 0x2000, scoped, tag = 'output window, operand 0, single buffered']
    %16 = vsyncpa [#allocation4], 0
    %17 = vsyncpa [#allocation7], 0
    %18 = vsyncpa [#allocation10], 0
    %19 = vsyncpa [#allocation13], 0
    %20 = vsyncpa [#allocation5], 0
    // Predicated region
    $region2: #{tpu_custom_call.1} parent=1 // pred_check
      _
    $region3: #{tpu_custom_call.1} parent=1 // pred_check_branch
      %22 = sbr.rel (0) target = $region5
    $region4: #{tpu_custom_call.1} parent=1 // pred_region
      %s24 = ssub.s32 256, 256
      %25 = vsyncadd [#allocation4], %s24
      %s26 = sshll.u32 [#allocation3], 4
      %s27 = int_to_ptr.vmem [resolvable:$true] %s26
      %32 = dma.hbm_to_vmem [thread:$0]  %s0, 256, %s27, [#allocation4], 128, 128, 8
    $region5: #{tpu_custom_call.1} parent=1 // pred_fallthru
      _
    // Predicated region
    $region6: #{tpu_custom_call.1} parent=1 // pred_check
      _
    $region7: #{tpu_custom_call.1} parent=1 // pred_check_branch
      %34 = sbr.rel (0) target = $region9
    $region8: #{tpu_custom_call.1} parent=1 // pred_region
      %s36 = ssub.s32 512, 512
      %37 = vsyncadd [#allocation7], %s36
      %s38 = sshll.u32 [#allocation6], 4
      %s39 = int_to_ptr.vmem [resolvable:$true] %s38
      %44 = dma.hbm_to_vmem [thread:$0]  %s1, 512, %s39, [#allocation7], 128, 128, 8
    $region9: #{tpu_custom_call.1} parent=1 // pred_fallthru
      _
    // Predicated region
    $region10: #{tpu_custom_call.1} parent=1 // pred_check
      _
    $region11: #{tpu_custom_call.1} parent=1 // pred_check_branch
      %46 = sbr.rel (0) target = $region13
    $region12: #{tpu_custom_call.1} parent=1 // pred_region
      _
    $region13: #{tpu_custom_call.1} parent=1 // pred_fallthru
      _
    // Predicated region
    $region14: #{tpu_custom_call.1} parent=1 // pred_check
      _
    $region15: #{tpu_custom_call.1} parent=1 // pred_check_branch
      %48 = sbr.rel (0) target = $region17
    $region16: #{tpu_custom_call.1} parent=1 // pred_region
      %s50 = ssub.s32 256, 256
      %51 = vsyncadd [#allocation7], %s50
      %s52 = sshll.u32 [#allocation8], 4
      %s53 = int_to_ptr.vmem [resolvable:$true] %s52
      %58 = dma.hbm_to_vmem [thread:$0]  %s3, 256, %s53, [#allocation7], 128, 128, 8
    $region17: #{tpu_custom_call.1} parent=1 // pred_fallthru
      _
    // Predicated region
    $region18: #{tpu_custom_call.1} parent=1 // pred_check
      _
    $region19: #{tpu_custom_call.1} parent=1 // pred_check_branch
      %60 = sbr.rel (0) target = $region21
    $region20: #{tpu_custom_call.1} parent=1 // pred_region
      %s62 = ssub.s32 256, 256
      %63 = vsyncadd [#allocation10], %s62
      %s64 = sshll.u32 [#allocation9], 4
      %s65 = int_to_ptr.vmem [resolvable:$true] %s64
      %70 = dma.hbm_to_vmem [thread:$0]  %s4, 256, %s65, [#allocation10], 128, 128, 8
    $region21: #{tpu_custom_call.1} parent=1 // pred_fallthru
      _
    // Predicated region
    $region22: #{tpu_custom_call.1} parent=1 // pred_check
      _
    $region23: #{tpu_custom_call.1} parent=1 // pred_check_branch
      %72 = sbr.rel (0) target = $region25
    $region24: #{tpu_custom_call.1} parent=1 // pred_region
      _
    $region25: #{tpu_custom_call.1} parent=1 // pred_fallthru
      _
    // Predicated region
    $region26: #{tpu_custom_call.1} parent=1 // pred_check
      _
    $region27: #{tpu_custom_call.1} parent=1 // pred_check_branch
      %74 = sbr.rel (0) target = $region29
    $region28: #{tpu_custom_call.1} parent=1 // pred_region
      %s76 = ssub.s32 256, 256
      %77 = vsyncadd [#allocation10], %s76
      %s78 = sshll.u32 [#allocation11], 4
      %s79 = int_to_ptr.vmem [resolvable:$true] %s78
      %84 = dma.hbm_to_vmem [thread:$0]  %s6, 256, %s79, [#allocation10], 128, 128, 8
    $region29: #{tpu_custom_call.1} parent=1 // pred_fallthru
      _
    // Predicated region
    $region30: #{tpu_custom_call.1} parent=1 // pred_check
      _
    $region31: #{tpu_custom_call.1} parent=1 // pred_check_branch
      %86 = sbr.rel (0) target = $region33
    $region32: #{tpu_custom_call.1} parent=1 // pred_region
      %s88 = ssub.s32 512, 512
      %89 = vsyncadd [#allocation13], %s88
      %s90 = sshll.u32 [#allocation12], 4
      %s91 = int_to_ptr.vmem [resolvable:$true] %s90
      %96 = dma.hbm_to_vmem [thread:$0]  %s7, 512, %s91, [#allocation13], 128, 128, 8
    $region33: #{tpu_custom_call.1} parent=1 // pred_fallthru
      _
    // Predicated region
    $region34: #{tpu_custom_call.1} parent=1 // pred_check
      _
    $region35: #{tpu_custom_call.1} parent=1 // pred_check_branch
      %98 = sbr.rel (0) target = $region37
    $region36: #{tpu_custom_call.1} parent=1 // pred_region
      _
    $region37: #{tpu_custom_call.1} parent=1 // pred_fallthru
      _
    // Predicated region
    $region38: #{tpu_custom_call.1} parent=1 // pred_check
      _
    $region39: #{tpu_custom_call.1} parent=1 // pred_check_branch
      %100 = sbr.rel (0) target = $region41
    $region40: #{tpu_custom_call.1} parent=1 // pred_region
      _
    $region41: #{tpu_custom_call.1} parent=1 // pred_fallthru
      _
    // Predicated region
    $region42: #{tpu_custom_call.1} parent=1 // pred_check
      _
    $region43: #{tpu_custom_call.1} parent=1 // pred_check_branch
      %102 = sbr.rel (0) target = $region45
    $region44: #{tpu_custom_call.1} parent=1 // pred_region
      _
    $region45: #{tpu_custom_call.1} parent=1 // pred_fallthru
      _
    // Predicated region
    $region46: #{tpu_custom_call.1} parent=1 // pred_check
      _
    $region47: #{tpu_custom_call.1} parent=1 // pred_check_branch
      %104 = sbr.rel (0) target = $region49
    $region48: #{tpu_custom_call.1} parent=1 // pred_region
      %105 = dma.done [#allocation4], 256
    $region49: #{tpu_custom_call.1} parent=1 // pred_fallthru
      _
    // Predicated region
    $region50: #{tpu_custom_call.1} parent=1 // pred_check
      _
    $region51: #{tpu_custom_call.1} parent=1 // pred_check_branch
      %107 = sbr.rel (0) target = $region53
    $region52: #{tpu_custom_call.1} parent=1 // pred_region
      %108 = dma.done [#allocation7], 512
    $region53: #{tpu_custom_call.1} parent=1 // pred_fallthru
      _
    // Predicated region
    $region54: #{tpu_custom_call.1} parent=1 // pred_check
      _
    $region55: #{tpu_custom_call.1} parent=1 // pred_check_branch
      %110 = sbr.rel (0) target = $region57
    $region56: #{tpu_custom_call.1} parent=1 // pred_region
      %111 = dma.done [#allocation7], 256
    $region57: #{tpu_custom_call.1} parent=1 // pred_fallthru
      _
    // Predicated region
    $region58: #{tpu_custom_call.1} parent=1 // pred_check
      _
    $region59: #{tpu_custom_call.1} parent=1 // pred_check_branch
      %113 = sbr.rel (0) target = $region61
    $region60: #{tpu_custom_call.1} parent=1 // pred_region
      %114 = dma.done [#allocation10], 256
    $region61: #{tpu_custom_call.1} parent=1 // pred_fallthru
      _
    // Predicated region
    $region62: #{tpu_custom_call.1} parent=1 // pred_check
      _
    $region63: #{tpu_custom_call.1} parent=1 // pred_check_branch
      %116 = sbr.rel (0) target = $region65
    $region64: #{tpu_custom_call.1} parent=1 // pred_region
      %117 = dma.done [#allocation10], 256
    $region65: #{tpu_custom_call.1} parent=1 // pred_fallthru
      _
    // Predicated region
    $region66: #{tpu_custom_call.1} parent=1 // pred_check
      _
    $region67: #{tpu_custom_call.1} parent=1 // pred_check_branch
      %119 = sbr.rel (0) target = $region69
    $region68: #{tpu_custom_call.1} parent=1 // pred_region
      %120 = dma.done [#allocation13], 512
    $region69: #{tpu_custom_call.1} parent=1 // pred_fallthru
      _
    %v121 = vld [vmem:[#allocation3] sm:$0xff]
    %v122 = vld [vmem:[#allocation3 + $0x8] sm:$0xff]
    %v123 = vld [vmem:[#allocation6] sm:$0xff]
    %v124 = vld [vmem:[#allocation6 + $0x8] sm:$0xff]
    %v125 = vld [vmem:[#allocation6 + $0x10] sm:$0xff]
    %v126 = vld [vmem:[#allocation6 + $0x18] sm:$0xff]
    %v127 = vld [vmem:[%s2] sm:$0x1]
    %v129 = vlaneseq
    %v130 = vshrl.u32 %v129, 7
    %v131 = vsub.s32 0, %v130
    %v132 = vrot.slane %v127, %v131
    %vm134 = vcmask 261120
    %v136 = vsel %vm134, %v121, 0
    %v139 = vsel %vm134, %v122, 0
    %141 = vmatprep.subr.mxu0 0.0
    %142 = vmatpush1.msra.mxu0 %v123
    %143 = vmatprep.subr.mxu0 0.0
    %144 = vmatpush1.msra.mxu0 %v124
    %145 = vmatprep.subr.mxu0 0.0
    %146 = vmatpush1.msra.mxu0 %v125
    %147 = vmatprep.subr.mxu0 0.0
    %148 = vmatpush1.msra.mxu0 %v126
    %149 = vmatprep.subr.mxu0 0.0
    %150 = vmatpush1.msra.mxu0 0.0
    %151 = vmatprep.subr.mxu0 0.0
    %152 = vmatpush1.msra.mxu0 0.0
    %153 = vmatprep.subr.mxu0 0.0
    %154 = vmatpush1.msra.mxu0 0.0
    %155 = vmatprep.subr.mxu0 0.0
    %156 = vmatpush1.msra.mxu0 0.0
    %157 = vmatprep.subr.mxu0 0.0
    %158 = vmatpush1.msra.mxu0 0.0
    %159 = vmatprep.subr.mxu0 0.0
    %160 = vmatpush1.msra.mxu0 0.0
    %161 = vmatprep.subr.mxu0 0.0
    %162 = vmatpush1.msra.mxu0 0.0
    %163 = vmatprep.subr.mxu0 0.0
    %164 = vmatpush1.msra.mxu0 0.0
    %165 = vmatprep.subr.mxu0 0.0
    %166 = vmatpush1.msra.mxu0 0.0
    %167 = vmatprep.subr.mxu0 0.0
    %168 = vmatpush1.msra.mxu0 0.0
    %169 = vmatprep.subr.mxu0 0.0
    %170 = vmatpush1.msra.mxu0 0.0
    %171 = vmatprep.subr.mxu0 0.0
    %172 = vmatpush1.msra.mxu0 0.0
    %173 = vmatprep.subr.mxu0 0.0
    %174 = vmatpush1.msra.mxu0 0.0
    %175 = vmatprep.subr.mxu0 0.0
    %176 = vmatpush1.msra.mxu0 0.0
    %177 = vmatprep.subr.mxu0 0.0
    %178 = vmatpush1.msra.mxu0 0.0
    %179 = vmatprep.subr.mxu0 0.0
    %180 = vmatpush1.msra.mxu0 0.0
    %181 = vmatprep.subr.mxu0 0.0
    %182 = vmatpush1.msra.mxu0 0.0
    %183 = vmatprep.subr.mxu0 0.0
    %184 = vmatpush1.msra.mxu0 0.0
    %185 = vmatprep.subr.mxu0 0.0
    %186 = vmatpush1.msra.mxu0 0.0
    %187 = vmatprep.subr.mxu0 0.0
    %188 = vmatpush1.msra.mxu0 0.0
    %189 = vmatprep.subr.mxu0 0.0
    %190 = vmatpush1.msra.mxu0 0.0
    %191 = vmatprep.subr.mxu0 0.0
    %192 = vmatpush1.msra.mxu0 0.0
    %193 = vmatprep.subr.mxu0 0.0
    %194 = vmatpush1.msra.mxu0 0.0
    %195 = vmatprep.subr.mxu0 0.0
    %196 = vmatpush1.msra.mxu0 0.0
    %197 = vmatprep.subr.mxu0 0.0
    %198 = vmatpush1.msra.mxu0 0.0
    %199 = vmatprep.subr.mxu0 0.0
    %200 = vmatpush1.msra.mxu0 0.0
    %201 = vmatprep.subr.mxu0 0.0
    %202 = vmatpush1.msra.mxu0 0.0
    %203 = vmatprep.subr.mxu0 0.0
    %204 = vmatpush1.msra.mxu0 0.0
    %205 = vmatprep.mubr.f32.mxu0 0.0
    %206 = vmatmul.mubr.f32.gmra.mrb[0].mxu0 %v136
    %v207 = vpop.f32.mrb[0].mxu0
    %v208 = vadd.f32 %v132, %v207
    %v209 = vpop.f32.mrb[0].mxu0
    %210 = vmatprep.mubr.f32.mxu0 0.0
    %211 = vmatmul.mubr.f32.gmra.mrb[0].mxu0 %v139
    %v212 = vpop.f32.mrb[0].mxu0
    %v213 = vadd.f32 %v132, %v212
    %v214 = vpop.f32.mrb[0].mxu0
    %215 = vdwg.mxu0
    %v216 = vld [vmem:[#allocation8] sm:$0xff]
    %v217 = vld [vmem:[#allocation8 + $0x8] sm:$0xff]
    %v218 = vmul.f32 %v208, %v216
    %v219 = vmul.f32 %v213, %v217
    %v220 = vld [vmem:[#allocation9] sm:$0xff]
    %v221 = vld [vmem:[#allocation9 + $0x8] sm:$0xff]
    %224 = vrot.lane.b32.xlu0 %v220, 32
    %v225 = vpop.permute.xlu0 %224
    %226 = vrot.lane.b32.xlu0 %v221, 32
    %v227 = vpop.permute.xlu0 %226
    %v230 = vmul.f32 %v208, %v225
    %v231 = vmul.f32 %v213, %v227
    %234 = vrot.lane.b32.xlu0 %v230, 96
    %v235 = vpop.permute.xlu0 %234
    %236 = vrot.lane.b32.xlu0 %v231, 96
    %v237 = vpop.permute.xlu0 %236
    %v240 = vadd.f32 %v218, %v235
    %v241 = vadd.f32 %v219, %v237
    %v242 = vld [vmem:[%s5] sm:$0xff]
    %v243 = vld [vmem:[%s5 + $0x8] sm:$0xff]
    %246 = vrot.lane.b32.xlu0 %v242, 64
    %v247 = vpop.permute.xlu0 %246
    %248 = vrot.lane.b32.xlu0 %v243, 64
    %v249 = vpop.permute.xlu0 %248
    %v252 = vmul.f32 %v208, %v247
    %v253 = vmul.f32 %v213, %v249
    %v254 = vld [vmem:[#allocation11] sm:$0xff]
    %v255 = vld [vmem:[#allocation11 + $0x8] sm:$0xff]
    %258 = vrot.lane.b32.xlu0 %v254, 80
    %v259 = vpop.permute.xlu0 %258
    %260 = vrot.lane.b32.xlu0 %v255, 80
    %v261 = vpop.permute.xlu0 %260
    %v264 = vmul.f32 %v208, %v259
    %v265 = vmul.f32 %v213, %v261
    %268 = vrot.lane.b32.xlu0 %v264, 112
    %v269 = vpop.permute.xlu0 %268
    %270 = vrot.lane.b32.xlu0 %v265, 112
    %v271 = vpop.permute.xlu0 %270
    %v274 = vadd.f32 %v252, %v269
    %v275 = vadd.f32 %v253, %v271
    %277 = vrot.lane.b32.xlu0 %v240, 120
    %v278 = vpop.permute.xlu0 %277
    %280 = vrot.lane.b32.xlu0 %v241, 120
    %v281 = vpop.permute.xlu0 %280
    %282 = vrot.lane.b32.xlu0 %v240, 112
    %v283 = vpop.permute.xlu0 %282
    %284 = vrot.lane.b32.xlu0 %v278, 112
    %v285 = vpop.permute.xlu0 %284
    %286 = vrot.lane.b32.xlu0 %v241, 112
    %v287 = vpop.permute.xlu0 %286
    %288 = vrot.lane.b32.xlu0 %v281, 112
    %v289 = vpop.permute.xlu0 %288
    %291 = vrot.lane.b32.xlu0 %v274, 120
    %v292 = vpop.permute.xlu0 %291
    %294 = vrot.lane.b32.xlu0 %v275, 120
    %v295 = vpop.permute.xlu0 %294
    %297 = vrot.lane.b32.xlu0 %v208, 120
    %v298 = vpop.permute.xlu0 %297
    %300 = vrot.lane.b32.xlu0 %v213, 120
    %v301 = vpop.permute.xlu0 %300
    %302 = vrot.lane.b32.xlu0 %v274, 64
    %v303 = vpop.permute.xlu0 %302
    %vm304 = vcmask 64512
    %v305 = vsel %vm304, %v240, 0
    %v307 = vsel %vm304, %v278, 0
    %v309 = vsel %vm304, %v303, 0
    %311 = vmatprep.subr.mxu0 0.0
    %312 = vmatpush1.xpose.msra.mxu0 %v309
    %313 = vmatprep.subr.mxu0 0.0
    %314 = vmatpush1.xpose.msra.mxu0 0.0
    %315 = vmatprep.subr.mxu0 0.0
    %316 = vmatpush1.xpose.msra.mxu0 0.0
    %317 = vmatprep.subr.mxu0 0.0
    %318 = vmatpush1.xpose.msra.mxu0 0.0
    %319 = vmatprep.subr.mxu0 0.0
    %320 = vmatpush1.xpose.msra.mxu0 0.0
    %321 = vmatprep.subr.mxu0 0.0
    %322 = vmatpush1.xpose.msra.mxu0 0.0
    %323 = vmatprep.subr.mxu0 0.0
    %324 = vmatpush1.xpose.msra.mxu0 0.0
    %325 = vmatprep.subr.mxu0 0.0
    %326 = vmatpush1.xpose.msra.mxu0 0.0
    %327 = vmatprep.subr.mxu0 0.0
    %328 = vmatpush1.xpose.msra.mxu0 0.0
    %329 = vmatprep.subr.mxu0 0.0
    %330 = vmatpush1.xpose.msra.mxu0 0.0
    %331 = vmatprep.subr.mxu0 0.0
    %332 = vmatpush1.xpose.msra.mxu0 0.0
    %333 = vmatprep.subr.mxu0 0.0
    %334 = vmatpush1.xpose.msra.mxu0 0.0
    %335 = vmatprep.subr.mxu0 0.0
    %336 = vmatpush1.xpose.msra.mxu0 0.0
    %337 = vmatprep.subr.mxu0 0.0
    %338 = vmatpush1.xpose.msra.mxu0 0.0
    %339 = vmatprep.subr.mxu0 0.0
    %340 = vmatpush1.xpose.msra.mxu0 0.0
    %341 = vmatprep.subr.mxu0 0.0
    %342 = vmatpush1.xpose.msra.mxu0 0.0
    %343 = vmatprep.subr.mxu0 0.0
    %344 = vmatpush1.xpose.msra.mxu0 0.0
    %345 = vmatprep.subr.mxu0 0.0
    %346 = vmatpush1.xpose.msra.mxu0 0.0
    %347 = vmatprep.subr.mxu0 0.0
    %348 = vmatpush1.xpose.msra.mxu0 0.0
    %349 = vmatprep.subr.mxu0 0.0
    %350 = vmatpush1.xpose.msra.mxu0 0.0
    %351 = vmatprep.subr.mxu0 0.0
    %352 = vmatpush1.xpose.msra.mxu0 0.0
    %353 = vmatprep.subr.mxu0 0.0
    %354 = vmatpush1.xpose.msra.mxu0 0.0
    %355 = vmatprep.subr.mxu0 0.0
    %356 = vmatpush1.xpose.msra.mxu0 0.0
    %357 = vmatprep.subr.mxu0 0.0
    %358 = vmatpush1.xpose.msra.mxu0 0.0
    %359 = vmatprep.subr.mxu0 0.0
    %360 = vmatpush1.xpose.msra.mxu0 0.0
    %361 = vmatprep.subr.mxu0 0.0
    %362 = vmatpush1.xpose.msra.mxu0 0.0
    %363 = vmatprep.subr.mxu0 0.0
    %364 = vmatpush1.xpose.msra.mxu0 0.0
    %365 = vmatprep.subr.mxu0 0.0
    %366 = vmatpush1.xpose.msra.mxu0 0.0
    %367 = vmatprep.subr.mxu0 0.0
    %368 = vmatpush1.xpose.msra.mxu0 0.0
    %369 = vmatprep.subr.mxu0 0.0
    %370 = vmatpush1.xpose.msra.mxu0 0.0
    %371 = vmatprep.subr.mxu0 0.0
    %372 = vmatpush1.xpose.msra.mxu0 0.0
    %373 = vmatprep.subr.mxu0 0.0
    %374 = vmatpush1.xpose.msra.mxu0 0.0
    %375 = vmatprep.mubr.f32.mxu0 0.0
    %376 = vmatmul.mubr.f32.gmra.mrb[0].mxu0 %v305
    %v377 = vpop.f32.mrb[0].mxu0
    %v378 = vadd.f32 0.0, %v377
    %v379 = vpop.f32.mrb[0].mxu0
    %380 = vmatprep.mubr.f32.mxu0 0.0
    %381 = vmatmul.mubr.f32.gmra.mrb[0].mxu0 %v307
    %v382 = vpop.f32.mrb[0].mxu0
    %v383 = vadd.f32 0.0, %v382
    %v384 = vpop.f32.mrb[0].mxu0
    %385 = vdwg.mxu0
    %386 = vrot.lane.b32.xlu0 %v292, 64
    %v387 = vpop.permute.xlu0 %386
    %v388 = vsel %vm304, %v283, 0
    %v390 = vsel %vm304, %v285, 0
    %v392 = vsel %vm304, %v387, 0
    %394 = vmatprep.subr.mxu0 0.0
    %395 = vmatpush1.xpose.msra.mxu0 %v392
    %396 = vmatprep.subr.mxu0 0.0
    %397 = vmatpush1.xpose.msra.mxu0 0.0
    %398 = vmatprep.subr.mxu0 0.0
    %399 = vmatpush1.xpose.msra.mxu0 0.0
    %400 = vmatprep.subr.mxu0 0.0
    %401 = vmatpush1.xpose.msra.mxu0 0.0
    %402 = vmatprep.subr.mxu0 0.0
    %403 = vmatpush1.xpose.msra.mxu0 0.0
    %404 = vmatprep.subr.mxu0 0.0
    %405 = vmatpush1.xpose.msra.mxu0 0.0
    %406 = vmatprep.subr.mxu0 0.0
    %407 = vmatpush1.xpose.msra.mxu0 0.0
    %408 = vmatprep.subr.mxu0 0.0
    %409 = vmatpush1.xpose.msra.mxu0 0.0
    %410 = vmatprep.subr.mxu0 0.0
    %411 = vmatpush1.xpose.msra.mxu0 0.0
    %412 = vmatprep.subr.mxu0 0.0
    %413 = vmatpush1.xpose.msra.mxu0 0.0
    %414 = vmatprep.subr.mxu0 0.0
    %415 = vmatpush1.xpose.msra.mxu0 0.0
    %416 = vmatprep.subr.mxu0 0.0
    %417 = vmatpush1.xpose.msra.mxu0 0.0
    %418 = vmatprep.subr.mxu0 0.0
    %419 = vmatpush1.xpose.msra.mxu0 0.0
    %420 = vmatprep.subr.mxu0 0.0
    %421 = vmatpush1.xpose.msra.mxu0 0.0
    %422 = vmatprep.subr.mxu0 0.0
    %423 = vmatpush1.xpose.msra.mxu0 0.0
    %424 = vmatprep.subr.mxu0 0.0
    %425 = vmatpush1.xpose.msra.mxu0 0.0
    %426 = vmatprep.subr.mxu0 0.0
    %427 = vmatpush1.xpose.msra.mxu0 0.0
    %428 = vmatprep.subr.mxu0 0.0
    %429 = vmatpush1.xpose.msra.mxu0 0.0
    %430 = vmatprep.subr.mxu0 0.0
    %431 = vmatpush1.xpose.msra.mxu0 0.0
    %432 = vmatprep.subr.mxu0 0.0
    %433 = vmatpush1.xpose.msra.mxu0 0.0
    %434 = vmatprep.subr.mxu0 0.0
    %435 = vmatpush1.xpose.msra.mxu0 0.0
    %436 = vmatprep.subr.mxu0 0.0
    %437 = vmatpush1.xpose.msra.mxu0 0.0
    %438 = vmatprep.subr.mxu0 0.0
    %439 = vmatpush1.xpose.msra.mxu0 0.0
    %440 = vmatprep.subr.mxu0 0.0
    %441 = vmatpush1.xpose.msra.mxu0 0.0
    %442 = vmatprep.subr.mxu0 0.0
    %443 = vmatpush1.xpose.msra.mxu0 0.0
    %444 = vmatprep.subr.mxu0 0.0
    %445 = vmatpush1.xpose.msra.mxu0 0.0
    %446 = vmatprep.subr.mxu0 0.0
    %447 = vmatpush1.xpose.msra.mxu0 0.0
    %448 = vmatprep.subr.mxu0 0.0
    %449 = vmatpush1.xpose.msra.mxu0 0.0
    %450 = vmatprep.subr.mxu0 0.0
    %451 = vmatpush1.xpose.msra.mxu0 0.0
    %452 = vmatprep.subr.mxu0 0.0
    %453 = vmatpush1.xpose.msra.mxu0 0.0
    %454 = vmatprep.subr.mxu0 0.0
    %455 = vmatpush1.xpose.msra.mxu0 0.0
    %456 = vmatprep.subr.mxu0 0.0
    %457 = vmatpush1.xpose.msra.mxu0 0.0
    %458 = vmatprep.mubr.f32.mxu0 0.0
    %459 = vmatmul.mubr.f32.gmra.mrb[0].mxu0 %v388
    %v460 = vpop.f32.mrb[0].mxu0
    %v461 = vadd.f32 0.0, %v460
    %v462 = vpop.f32.mrb[0].mxu0
    %463 = vmatprep.mubr.f32.mxu0 0.0
    %464 = vmatmul.mubr.f32.gmra.mrb[0].mxu0 %v390
    %v465 = vpop.f32.mrb[0].mxu0
    %v466 = vadd.f32 0.0, %v465
    %v467 = vpop.f32.mrb[0].mxu0
    %468 = vdwg.mxu0
    %469 = vrot.lane.b32.xlu0 %v275, 64
    %v470 = vpop.permute.xlu0 %469
    %v471 = vsel %vm304, %v241, 0
    %v473 = vsel %vm304, %v281, 0
    %v475 = vsel %vm304, %v470, 0
    %477 = vmatprep.subr.mxu0 0.0
    %478 = vmatpush1.xpose.msra.mxu0 %v475
    %479 = vmatprep.subr.mxu0 0.0
    %480 = vmatpush1.xpose.msra.mxu0 0.0
    %481 = vmatprep.subr.mxu0 0.0
    %482 = vmatpush1.xpose.msra.mxu0 0.0
    %483 = vmatprep.subr.mxu0 0.0
    %484 = vmatpush1.xpose.msra.mxu0 0.0
    %485 = vmatprep.subr.mxu0 0.0
    %486 = vmatpush1.xpose.msra.mxu0 0.0
    %487 = vmatprep.subr.mxu0 0.0
    %488 = vmatpush1.xpose.msra.mxu0 0.0
    %489 = vmatprep.subr.mxu0 0.0
    %490 = vmatpush1.xpose.msra.mxu0 0.0
    %491 = vmatprep.subr.mxu0 0.0
    %492 = vmatpush1.xpose.msra.mxu0 0.0
    %493 = vmatprep.subr.mxu0 0.0
    %494 = vmatpush1.xpose.msra.mxu0 0.0
    %495 = vmatprep.subr.mxu0 0.0
    %496 = vmatpush1.xpose.msra.mxu0 0.0
    %497 = vmatprep.subr.mxu0 0.0
    %498 = vmatpush1.xpose.msra.mxu0 0.0
    %499 = vmatprep.subr.mxu0 0.0
    %500 = vmatpush1.xpose.msra.mxu0 0.0
    %501 = vmatprep.subr.mxu0 0.0
    %502 = vmatpush1.xpose.msra.mxu0 0.0
    %503 = vmatprep.subr.mxu0 0.0
    %504 = vmatpush1.xpose.msra.mxu0 0.0
    %505 = vmatprep.subr.mxu0 0.0
    %506 = vmatpush1.xpose.msra.mxu0 0.0
    %507 = vmatprep.subr.mxu0 0.0
    %508 = vmatpush1.xpose.msra.mxu0 0.0
    %509 = vmatprep.subr.mxu0 0.0
    %510 = vmatpush1.xpose.msra.mxu0 0.0
    %511 = vmatprep.subr.mxu0 0.0
    %512 = vmatpush1.xpose.msra.mxu0 0.0
    %513 = vmatprep.subr.mxu0 0.0
    %514 = vmatpush1.xpose.msra.mxu0 0.0
    %515 = vmatprep.subr.mxu0 0.0
    %516 = vmatpush1.xpose.msra.mxu0 0.0
    %517 = vmatprep.subr.mxu0 0.0
    %518 = vmatpush1.xpose.msra.mxu0 0.0
    %519 = vmatprep.subr.mxu0 0.0
    %520 = vmatpush1.xpose.msra.mxu0 0.0
    %521 = vmatprep.subr.mxu0 0.0
    %522 = vmatpush1.xpose.msra.mxu0 0.0
    %523 = vmatprep.subr.mxu0 0.0
    %524 = vmatpush1.xpose.msra.mxu0 0.0
    %525 = vmatprep.subr.mxu0 0.0
    %526 = vmatpush1.xpose.msra.mxu0 0.0
    %527 = vmatprep.subr.mxu0 0.0
    %528 = vmatpush1.xpose.msra.mxu0 0.0
    %529 = vmatprep.subr.mxu0 0.0
    %530 = vmatpush1.xpose.msra.mxu0 0.0
    %531 = vmatprep.subr.mxu0 0.0
    %532 = vmatpush1.xpose.msra.mxu0 0.0
    %533 = vmatprep.subr.mxu0 0.0
    %534 = vmatpush1.xpose.msra.mxu0 0.0
    %535 = vmatprep.subr.mxu0 0.0
    %536 = vmatpush1.xpose.msra.mxu0 0.0
    %537 = vmatprep.subr.mxu0 0.0
    %538 = vmatpush1.xpose.msra.mxu0 0.0
    %539 = vmatprep.subr.mxu0 0.0
    %540 = vmatpush1.xpose.msra.mxu0 0.0
    %541 = vmatprep.mubr.f32.mxu0 0.0
    %542 = vmatmul.mubr.f32.gmra.mrb[0].mxu0 %v471
    %v543 = vpop.f32.mrb[0].mxu0
    %v544 = vadd.f32 0.0, %v543
    %v545 = vpop.f32.mrb[0].mxu0
    %546 = vmatprep.mubr.f32.mxu0 0.0
    %547 = vmatmul.mubr.f32.gmra.mrb[0].mxu0 %v473
    %v548 = vpop.f32.mrb[0].mxu0
    %v549 = vadd.f32 0.0, %v548
    %v550 = vpop.f32.mrb[0].mxu0
    %551 = vdwg.mxu0
    %552 = vrot.lane.b32.xlu0 %v295, 64
    %v553 = vpop.permute.xlu0 %552
    %v554 = vsel %vm304, %v287, 0
    %v556 = vsel %vm304, %v289, 0
    %v558 = vsel %vm304, %v553, 0
    %560 = vmatprep.subr.mxu0 0.0
    %561 = vmatpush1.xpose.msra.mxu0 %v558
    %562 = vmatprep.subr.mxu0 0.0
    %563 = vmatpush1.xpose.msra.mxu0 0.0
    %564 = vmatprep.subr.mxu0 0.0
    %565 = vmatpush1.xpose.msra.mxu0 0.0
    %566 = vmatprep.subr.mxu0 0.0
    %567 = vmatpush1.xpose.msra.mxu0 0.0
    %568 = vmatprep.subr.mxu0 0.0
    %569 = vmatpush1.xpose.msra.mxu0 0.0
    %570 = vmatprep.subr.mxu0 0.0
    %571 = vmatpush1.xpose.msra.mxu0 0.0
    %572 = vmatprep.subr.mxu0 0.0
    %573 = vmatpush1.xpose.msra.mxu0 0.0
    %574 = vmatprep.subr.mxu0 0.0
    %575 = vmatpush1.xpose.msra.mxu0 0.0
    %576 = vmatprep.subr.mxu0 0.0
    %577 = vmatpush1.xpose.msra.mxu0 0.0
    %578 = vmatprep.subr.mxu0 0.0
    %579 = vmatpush1.xpose.msra.mxu0 0.0
    %580 = vmatprep.subr.mxu0 0.0
    %581 = vmatpush1.xpose.msra.mxu0 0.0
    %582 = vmatprep.subr.mxu0 0.0
    %583 = vmatpush1.xpose.msra.mxu0 0.0
    %584 = vmatprep.subr.mxu0 0.0
    %585 = vmatpush1.xpose.msra.mxu0 0.0
    %586 = vmatprep.subr.mxu0 0.0
    %587 = vmatpush1.xpose.msra.mxu0 0.0
    %588 = vmatprep.subr.mxu0 0.0
    %589 = vmatpush1.xpose.msra.mxu0 0.0
    %590 = vmatprep.subr.mxu0 0.0
    %591 = vmatpush1.xpose.msra.mxu0 0.0
    %592 = vmatprep.subr.mxu0 0.0
    %593 = vmatpush1.xpose.msra.mxu0 0.0
    %594 = vmatprep.subr.mxu0 0.0
    %595 = vmatpush1.xpose.msra.mxu0 0.0
    %596 = vmatprep.subr.mxu0 0.0
    %597 = vmatpush1.xpose.msra.mxu0 0.0
    %598 = vmatprep.subr.mxu0 0.0
    %599 = vmatpush1.xpose.msra.mxu0 0.0
    %600 = vmatprep.subr.mxu0 0.0
    %601 = vmatpush1.xpose.msra.mxu0 0.0
    %602 = vmatprep.subr.mxu0 0.0
    %603 = vmatpush1.xpose.msra.mxu0 0.0
    %604 = vmatprep.subr.mxu0 0.0
    %605 = vmatpush1.xpose.msra.mxu0 0.0
    %606 = vmatprep.subr.mxu0 0.0
    %607 = vmatpush1.xpose.msra.mxu0 0.0
    %608 = vmatprep.subr.mxu0 0.0
    %609 = vmatpush1.xpose.msra.mxu0 0.0
    %610 = vmatprep.subr.mxu0 0.0
    %611 = vmatpush1.xpose.msra.mxu0 0.0
    %612 = vmatprep.subr.mxu0 0.0
    %613 = vmatpush1.xpose.msra.mxu0 0.0
    %614 = vmatprep.subr.mxu0 0.0
    %615 = vmatpush1.xpose.msra.mxu0 0.0
    %616 = vmatprep.subr.mxu0 0.0
    %617 = vmatpush1.xpose.msra.mxu0 0.0
    %618 = vmatprep.subr.mxu0 0.0
    %619 = vmatpush1.xpose.msra.mxu0 0.0
    %620 = vmatprep.subr.mxu0 0.0
    %621 = vmatpush1.xpose.msra.mxu0 0.0
    %622 = vmatprep.subr.mxu0 0.0
    %623 = vmatpush1.xpose.msra.mxu0 0.0
    %624 = vmatprep.mubr.f32.mxu0 0.0
    %625 = vmatmul.mubr.f32.gmra.mrb[0].mxu0 %v554
    %v626 = vpop.f32.mrb[0].mxu0
    %v627 = vadd.f32 0.0, %v626
    %v628 = vpop.f32.mrb[0].mxu0
    %629 = vmatprep.mubr.f32.mxu0 0.0
    %630 = vmatmul.mubr.f32.gmra.mrb[0].mxu0 %v556
    %v631 = vpop.f32.mrb[0].mxu0
    %v632 = vadd.f32 0.0, %v631
    %v633 = vpop.f32.mrb[0].mxu0
    %634 = vdwg.mxu0
    %v635 = vsel %vm304, %v378, -inf
    %636 = vmax.xlane.f32.xlu0 %v635
    %v637 = vpop.xlane.xlu0 %636
    %v638 = vsel %vm304, %v383, -inf
    %639 = vmax.xlane.f32.xlu0 %v638
    %v640 = vpop.xlane.xlu0 %639
    %v641 = vsel %vm304, %v461, -inf
    %642 = vmax.xlane.f32.xlu0 %v641
    %v643 = vpop.xlane.xlu0 %642
    %v644 = vsel %vm304, %v466, -inf
    %645 = vmax.xlane.f32.xlu0 %v644
    %v646 = vpop.xlane.xlu0 %645
    %v647 = vsel %vm304, %v544, -inf
    %648 = vmax.xlane.f32.xlu0 %v647
    %v649 = vpop.xlane.xlu0 %648
    %v650 = vsel %vm304, %v549, -inf
    %651 = vmax.xlane.f32.xlu0 %v650
    %v652 = vpop.xlane.xlu0 %651
    %v653 = vsel %vm304, %v627, -inf
    %654 = vmax.xlane.f32.xlu0 %v653
    %v655 = vpop.xlane.xlu0 %654
    %v656 = vsel %vm304, %v632, -inf
    %657 = vmax.xlane.f32.xlu0 %v656
    %v658 = vpop.xlane.xlu0 %657
    %v659 = vsub.f32 %v378, %v637
    %v660 = vsub.f32 %v383, %v640
    %v661 = vsub.f32 %v461, %v643
    %v662 = vsub.f32 %v466, %v646
    %v663 = vsub.f32 %v544, %v649
    %v664 = vsub.f32 %v549, %v652
    %v665 = vsub.f32 %v627, %v655
    %v666 = vsub.f32 %v632, %v658
    %v667 = vmul.f32 %v659, 1.442695
    %v668 = vpow.pop %v667
    %v669 = vmul.f32 %v660, 1.442695
    %v670 = vpow.pop %v669
    %v671 = vmul.f32 %v661, 1.442695
    %v672 = vpow.pop %v671
    %v673 = vmul.f32 %v662, 1.442695
    %v674 = vpow.pop %v673
    %v675 = vmul.f32 %v663, 1.442695
    %v676 = vpow.pop %v675
    %v677 = vmul.f32 %v664, 1.442695
    %v678 = vpow.pop %v677
    %v679 = vmul.f32 %v665, 1.442695
    %v680 = vpow.pop %v679
    %v681 = vmul.f32 %v666, 1.442695
    %v682 = vpow.pop %v681
    %v683 = vsel %vm304, %v668, 0.0
    %684 = vadd.xlane.f32.xlu0 %v683
    %v685 = vpop.xlane.xlu0 %684
    %v686 = vsel %vm304, %v670, 0.0
    %687 = vadd.xlane.f32.xlu0 %v686
    %v688 = vpop.xlane.xlu0 %687
    %v689 = vsel %vm304, %v672, 0.0
    %690 = vadd.xlane.f32.xlu0 %v689
    %v691 = vpop.xlane.xlu0 %690
    %v692 = vsel %vm304, %v674, 0.0
    %693 = vadd.xlane.f32.xlu0 %v692
    %v694 = vpop.xlane.xlu0 %693
    %v695 = vsel %vm304, %v676, 0.0
    %696 = vadd.xlane.f32.xlu0 %v695
    %v697 = vpop.xlane.xlu0 %696
    %v698 = vsel %vm304, %v678, 0.0
    %699 = vadd.xlane.f32.xlu0 %v698
    %v700 = vpop.xlane.xlu0 %699
    %v701 = vsel %vm304, %v680, 0.0
    %702 = vadd.xlane.f32.xlu0 %v701
    %v703 = vpop.xlane.xlu0 %702
    %v704 = vsel %vm304, %v682, 0.0
    %705 = vadd.xlane.f32.xlu0 %v704
    %v706 = vpop.xlane.xlu0 %705
    %707 = vrot.lane.b32.xlu0 %v208, 32
    %v708 = vpop.permute.xlu0 %707
    %v711 = vsel %vm304, %v668, 0
    %v714 = vsel %vm304, %v670, 0
    %716 = vmatprep.subr.mxu0 0.0
    %717 = vmatpush1.msra.mxu0 %v708
    %718 = vmatprep.subr.mxu0 0.0
    %719 = vmatpush1.msra.mxu0 0.0
    %720 = vmatprep.subr.mxu0 0.0
    %721 = vmatpush1.msra.mxu0 0.0
    %722 = vmatprep.subr.mxu0 0.0
    %723 = vmatpush1.msra.mxu0 0.0
    %724 = vmatprep.subr.mxu0 0.0
    %725 = vmatpush1.msra.mxu0 0.0
    %726 = vmatprep.subr.mxu0 0.0
    %727 = vmatpush1.msra.mxu0 0.0
    %728 = vmatprep.subr.mxu0 0.0
    %729 = vmatpush1.msra.mxu0 0.0
    %730 = vmatprep.subr.mxu0 0.0
    %731 = vmatpush1.msra.mxu0 0.0
    %732 = vmatprep.subr.mxu0 0.0
    %733 = vmatpush1.msra.mxu0 0.0
    %734 = vmatprep.subr.mxu0 0.0
    %735 = vmatpush1.msra.mxu0 0.0
    %736 = vmatprep.subr.mxu0 0.0
    %737 = vmatpush1.msra.mxu0 0.0
    %738 = vmatprep.subr.mxu0 0.0
    %739 = vmatpush1.msra.mxu0 0.0
    %740 = vmatprep.subr.mxu0 0.0
    %741 = vmatpush1.msra.mxu0 0.0
    %742 = vmatprep.subr.mxu0 0.0
    %743 = vmatpush1.msra.mxu0 0.0
    %744 = vmatprep.subr.mxu0 0.0
    %745 = vmatpush1.msra.mxu0 0.0
    %746 = vmatprep.subr.mxu0 0.0
    %747 = vmatpush1.msra.mxu0 0.0
    %748 = vmatprep.subr.mxu0 0.0
    %749 = vmatpush1.msra.mxu0 0.0
    %750 = vmatprep.subr.mxu0 0.0
    %751 = vmatpush1.msra.mxu0 0.0
    %752 = vmatprep.subr.mxu0 0.0
    %753 = vmatpush1.msra.mxu0 0.0
    %754 = vmatprep.subr.mxu0 0.0
    %755 = vmatpush1.msra.mxu0 0.0
    %756 = vmatprep.subr.mxu0 0.0
    %757 = vmatpush1.msra.mxu0 0.0
    %758 = vmatprep.subr.mxu0 0.0
    %759 = vmatpush1.msra.mxu0 0.0
    %760 = vmatprep.subr.mxu0 0.0
    %761 = vmatpush1.msra.mxu0 0.0
    %762 = vmatprep.subr.mxu0 0.0
    %763 = vmatpush1.msra.mxu0 0.0
    %764 = vmatprep.subr.mxu0 0.0
    %765 = vmatpush1.msra.mxu0 0.0
    %766 = vmatprep.subr.mxu0 0.0
    %767 = vmatpush1.msra.mxu0 0.0
    %768 = vmatprep.subr.mxu0 0.0
    %769 = vmatpush1.msra.mxu0 0.0
    %770 = vmatprep.subr.mxu0 0.0
    %771 = vmatpush1.msra.mxu0 0.0
    %772 = vmatprep.subr.mxu0 0.0
    %773 = vmatpush1.msra.mxu0 0.0
    %774 = vmatprep.subr.mxu0 0.0
    %775 = vmatpush1.msra.mxu0 0.0
    %776 = vmatprep.subr.mxu0 0.0
    %777 = vmatpush1.msra.mxu0 0.0
    %778 = vmatprep.subr.mxu0 0.0
    %779 = vmatpush1.msra.mxu0 0.0
    %780 = vmatprep.mubr.f32.mxu0 0.0
    %781 = vmatmul.mubr.f32.gmra.mrb[0].mxu0 %v711
    %v782 = vpop.f32.mrb[0].mxu0
    %v783 = vadd.f32 0.0, %v782
    %v784 = vpop.f32.mrb[0].mxu0
    %785 = vmatprep.mubr.f32.mxu0 0.0
    %786 = vmatmul.mubr.f32.gmra.mrb[0].mxu0 %v714
    %v787 = vpop.f32.mrb[0].mxu0
    %v788 = vadd.f32 0.0, %v787
    %v789 = vpop.f32.mrb[0].mxu0
    %790 = vdwg.mxu0
    %791 = vrot.lane.b32.xlu0 %v298, 32
    %v792 = vpop.permute.xlu0 %791
    %v795 = vsel %vm304, %v672, 0
    %v798 = vsel %vm304, %v674, 0
    %800 = vmatprep.subr.mxu0 0.0
    %801 = vmatpush1.msra.mxu0 %v792
    %802 = vmatprep.subr.mxu0 0.0
    %803 = vmatpush1.msra.mxu0 0.0
    %804 = vmatprep.subr.mxu0 0.0
    %805 = vmatpush1.msra.mxu0 0.0
    %806 = vmatprep.subr.mxu0 0.0
    %807 = vmatpush1.msra.mxu0 0.0
    %808 = vmatprep.subr.mxu0 0.0
    %809 = vmatpush1.msra.mxu0 0.0
    %810 = vmatprep.subr.mxu0 0.0
    %811 = vmatpush1.msra.mxu0 0.0
    %812 = vmatprep.subr.mxu0 0.0
    %813 = vmatpush1.msra.mxu0 0.0
    %814 = vmatprep.subr.mxu0 0.0
    %815 = vmatpush1.msra.mxu0 0.0
    %816 = vmatprep.subr.mxu0 0.0
    %817 = vmatpush1.msra.mxu0 0.0
    %818 = vmatprep.subr.mxu0 0.0
    %819 = vmatpush1.msra.mxu0 0.0
    %820 = vmatprep.subr.mxu0 0.0
    %821 = vmatpush1.msra.mxu0 0.0
    %822 = vmatprep.subr.mxu0 0.0
    %823 = vmatpush1.msra.mxu0 0.0
    %824 = vmatprep.subr.mxu0 0.0
    %825 = vmatpush1.msra.mxu0 0.0
    %826 = vmatprep.subr.mxu0 0.0
    %827 = vmatpush1.msra.mxu0 0.0
    %828 = vmatprep.subr.mxu0 0.0
    %829 = vmatpush1.msra.mxu0 0.0
    %830 = vmatprep.subr.mxu0 0.0
    %831 = vmatpush1.msra.mxu0 0.0
    %832 = vmatprep.subr.mxu0 0.0
    %833 = vmatpush1.msra.mxu0 0.0
    %834 = vmatprep.subr.mxu0 0.0
    %835 = vmatpush1.msra.mxu0 0.0
    %836 = vmatprep.subr.mxu0 0.0
    %837 = vmatpush1.msra.mxu0 0.0
    %838 = vmatprep.subr.mxu0 0.0
    %839 = vmatpush1.msra.mxu0 0.0
    %840 = vmatprep.subr.mxu0 0.0
    %841 = vmatpush1.msra.mxu0 0.0
    %842 = vmatprep.subr.mxu0 0.0
    %843 = vmatpush1.msra.mxu0 0.0
    %844 = vmatprep.subr.mxu0 0.0
    %845 = vmatpush1.msra.mxu0 0.0
    %846 = vmatprep.subr.mxu0 0.0
    %847 = vmatpush1.msra.mxu0 0.0
    %848 = vmatprep.subr.mxu0 0.0
    %849 = vmatpush1.msra.mxu0 0.0
    %850 = vmatprep.subr.mxu0 0.0
    %851 = vmatpush1.msra.mxu0 0.0
    %852 = vmatprep.subr.mxu0 0.0
    %853 = vmatpush1.msra.mxu0 0.0
    %854 = vmatprep.subr.mxu0 0.0
    %855 = vmatpush1.msra.mxu0 0.0
    %856 = vmatprep.subr.mxu0 0.0
    %857 = vmatpush1.msra.mxu0 0.0
    %858 = vmatprep.subr.mxu0 0.0
    %859 = vmatpush1.msra.mxu0 0.0
    %860 = vmatprep.subr.mxu0 0.0
    %861 = vmatpush1.msra.mxu0 0.0
    %862 = vmatprep.subr.mxu0 0.0
    %863 = vmatpush1.msra.mxu0 0.0
    %864 = vmatprep.mubr.f32.mxu0 0.0
    %865 = vmatmul.mubr.f32.gmra.mrb[0].mxu0 %v795
    %v866 = vpop.f32.mrb[0].mxu0
    %v867 = vadd.f32 0.0, %v866
    %v868 = vpop.f32.mrb[0].mxu0
    %869 = vmatprep.mubr.f32.mxu0 0.0
    %870 = vmatmul.mubr.f32.gmra.mrb[0].mxu0 %v798
    %v871 = vpop.f32.mrb[0].mxu0
    %v872 = vadd.f32 0.0, %v871
    %v873 = vpop.f32.mrb[0].mxu0
    %874 = vdwg.mxu0
    %875 = vrot.lane.b32.xlu0 %v213, 32
    %v876 = vpop.permute.xlu0 %875
    %v879 = vsel %vm304, %v676, 0
    %v882 = vsel %vm304, %v678, 0
    %884 = vmatprep.subr.mxu0 0.0
    %885 = vmatpush1.msra.mxu0 %v876
    %886 = vmatprep.subr.mxu0 0.0
    %887 = vmatpush1.msra.mxu0 0.0
    %888 = vmatprep.subr.mxu0 0.0
    %889 = vmatpush1.msra.mxu0 0.0
    %890 = vmatprep.subr.mxu0 0.0
    %891 = vmatpush1.msra.mxu0 0.0
    %892 = vmatprep.subr.mxu0 0.0
    %893 = vmatpush1.msra.mxu0 0.0
    %894 = vmatprep.subr.mxu0 0.0
    %895 = vmatpush1.msra.mxu0 0.0
    %896 = vmatprep.subr.mxu0 0.0
    %897 = vmatpush1.msra.mxu0 0.0
    %898 = vmatprep.subr.mxu0 0.0
    %899 = vmatpush1.msra.mxu0 0.0
    %900 = vmatprep.subr.mxu0 0.0
    %901 = vmatpush1.msra.mxu0 0.0
    %902 = vmatprep.subr.mxu0 0.0
    %903 = vmatpush1.msra.mxu0 0.0
    %904 = vmatprep.subr.mxu0 0.0
    %905 = vmatpush1.msra.mxu0 0.0
    %906 = vmatprep.subr.mxu0 0.0
    %907 = vmatpush1.msra.mxu0 0.0
    %908 = vmatprep.subr.mxu0 0.0
    %909 = vmatpush1.msra.mxu0 0.0
    %910 = vmatprep.subr.mxu0 0.0
    %911 = vmatpush1.msra.mxu0 0.0
    %912 = vmatprep.subr.mxu0 0.0
    %913 = vmatpush1.msra.mxu0 0.0
    %914 = vmatprep.subr.mxu0 0.0
    %915 = vmatpush1.msra.mxu0 0.0
    %916 = vmatprep.subr.mxu0 0.0
    %917 = vmatpush1.msra.mxu0 0.0
    %918 = vmatprep.subr.mxu0 0.0
    %919 = vmatpush1.msra.mxu0 0.0
    %920 = vmatprep.subr.mxu0 0.0
    %921 = vmatpush1.msra.mxu0 0.0
    %922 = vmatprep.subr.mxu0 0.0
    %923 = vmatpush1.msra.mxu0 0.0
    %924 = vmatprep.subr.mxu0 0.0
    %925 = vmatpush1.msra.mxu0 0.0
    %926 = vmatprep.subr.mxu0 0.0
    %927 = vmatpush1.msra.mxu0 0.0
    %928 = vmatprep.subr.mxu0 0.0
    %929 = vmatpush1.msra.mxu0 0.0
    %930 = vmatprep.subr.mxu0 0.0
    %931 = vmatpush1.msra.mxu0 0.0
    %932 = vmatprep.subr.mxu0 0.0
    %933 = vmatpush1.msra.mxu0 0.0
    %934 = vmatprep.subr.mxu0 0.0
    %935 = vmatpush1.msra.mxu0 0.0
    %936 = vmatprep.subr.mxu0 0.0
    %937 = vmatpush1.msra.mxu0 0.0
    %938 = vmatprep.subr.mxu0 0.0
    %939 = vmatpush1.msra.mxu0 0.0
    %940 = vmatprep.subr.mxu0 0.0
    %941 = vmatpush1.msra.mxu0 0.0
    %942 = vmatprep.subr.mxu0 0.0
    %943 = vmatpush1.msra.mxu0 0.0
    %944 = vmatprep.subr.mxu0 0.0
    %945 = vmatpush1.msra.mxu0 0.0
    %946 = vmatprep.subr.mxu0 0.0
    %947 = vmatpush1.msra.mxu0 0.0
    %948 = vmatprep.mubr.f32.mxu0 0.0
    %949 = vmatmul.mubr.f32.gmra.mrb[0].mxu0 %v879
    %v950 = vpop.f32.mrb[0].mxu0
    %v951 = vadd.f32 0.0, %v950
    %v952 = vpop.f32.mrb[0].mxu0
    %953 = vmatprep.mubr.f32.mxu0 0.0
    %954 = vmatmul.mubr.f32.gmra.mrb[0].mxu0 %v882
    %v955 = vpop.f32.mrb[0].mxu0
    %v956 = vadd.f32 0.0, %v955
    %v957 = vpop.f32.mrb[0].mxu0
    %958 = vdwg.mxu0
    %959 = vrot.lane.b32.xlu0 %v301, 32
    %v960 = vpop.permute.xlu0 %959
    %v963 = vsel %vm304, %v680, 0
    %v966 = vsel %vm304, %v682, 0
    %968 = vmatprep.subr.mxu0 0.0
    %969 = vmatpush1.msra.mxu0 %v960
    %970 = vmatprep.subr.mxu0 0.0
    %971 = vmatpush1.msra.mxu0 0.0
    %972 = vmatprep.subr.mxu0 0.0
    %973 = vmatpush1.msra.mxu0 0.0
    %974 = vmatprep.subr.mxu0 0.0
    %975 = vmatpush1.msra.mxu0 0.0
    %976 = vmatprep.subr.mxu0 0.0
    %977 = vmatpush1.msra.mxu0 0.0
    %978 = vmatprep.subr.mxu0 0.0
    %979 = vmatpush1.msra.mxu0 0.0
    %980 = vmatprep.subr.mxu0 0.0
    %981 = vmatpush1.msra.mxu0 0.0
    %982 = vmatprep.subr.mxu0 0.0
    %983 = vmatpush1.msra.mxu0 0.0
    %984 = vmatprep.subr.mxu0 0.0
    %985 = vmatpush1.msra.mxu0 0.0
    %986 = vmatprep.subr.mxu0 0.0
    %987 = vmatpush1.msra.mxu0 0.0
    %988 = vmatprep.subr.mxu0 0.0
    %989 = vmatpush1.msra.mxu0 0.0
    %990 = vmatprep.subr.mxu0 0.0
    %991 = vmatpush1.msra.mxu0 0.0
    %992 = vmatprep.subr.mxu0 0.0
    %993 = vmatpush1.msra.mxu0 0.0
    %994 = vmatprep.subr.mxu0 0.0
    %995 = vmatpush1.msra.mxu0 0.0
    %996 = vmatprep.subr.mxu0 0.0
    %997 = vmatpush1.msra.mxu0 0.0
    %998 = vmatprep.subr.mxu0 0.0
    %999 = vmatpush1.msra.mxu0 0.0
    %1000 = vmatprep.subr.mxu0 0.0
    %1001 = vmatpush1.msra.mxu0 0.0
    %1002 = vmatprep.subr.mxu0 0.0
    %1003 = vmatpush1.msra.mxu0 0.0
    %1004 = vmatprep.subr.mxu0 0.0
    %1005 = vmatpush1.msra.mxu0 0.0
    %1006 = vmatprep.subr.mxu0 0.0
    %1007 = vmatpush1.msra.mxu0 0.0
    %1008 = vmatprep.subr.mxu0 0.0
    %1009 = vmatpush1.msra.mxu0 0.0
    %1010 = vmatprep.subr.mxu0 0.0
    %1011 = vmatpush1.msra.mxu0 0.0
    %1012 = vmatprep.subr.mxu0 0.0
    %1013 = vmatpush1.msra.mxu0 0.0
    %1014 = vmatprep.subr.mxu0 0.0
    %1015 = vmatpush1.msra.mxu0 0.0
    %1016 = vmatprep.subr.mxu0 0.0
    %1017 = vmatpush1.msra.mxu0 0.0
    %1018 = vmatprep.subr.mxu0 0.0
    %1019 = vmatpush1.msra.mxu0 0.0
    %1020 = vmatprep.subr.mxu0 0.0
    %1021 = vmatpush1.msra.mxu0 0.0
    %1022 = vmatprep.subr.mxu0 0.0
    %1023 = vmatpush1.msra.mxu0 0.0
    %1024 = vmatprep.subr.mxu0 0.0
    %1025 = vmatpush1.msra.mxu0 0.0
    %1026 = vmatprep.subr.mxu0 0.0
    %1027 = vmatpush1.msra.mxu0 0.0
    %1028 = vmatprep.subr.mxu0 0.0
    %1029 = vmatpush1.msra.mxu0 0.0
    %1030 = vmatprep.subr.mxu0 0.0
    %1031 = vmatpush1.msra.mxu0 0.0
    %1032 = vmatprep.mubr.f32.mxu0 0.0
    %1033 = vmatmul.mubr.f32.gmra.mrb[0].mxu0 %v963
    %v1034 = vpop.f32.mrb[0].mxu0
    %v1035 = vadd.f32 0.0, %v1034
    %v1036 = vpop.f32.mrb[0].mxu0
    %1037 = vmatprep.mubr.f32.mxu0 0.0
    %1038 = vmatmul.mubr.f32.gmra.mrb[0].mxu0 %v966
    %v1039 = vpop.f32.mrb[0].mxu0
    %v1040 = vadd.f32 0.0, %v1039
    %v1041 = vpop.f32.mrb[0].mxu0
    %1042 = vdwg.mxu0
    %v1043 = vrcp.pop %v685
    %v1044 = vrcp.pop %v688
    %v1045 = vrcp.pop %v691
    %v1046 = vrcp.pop %v694
    %v1047 = vrcp.pop %v697
    %v1048 = vrcp.pop %v700
    %v1049 = vrcp.pop %v703
    %v1050 = vrcp.pop %v706
    %v1051 = vmul.f32 %v783, %v1043
    %v1052 = vmul.f32 %v788, %v1044
    %v1053 = vmul.f32 %v867, %v1045
    %v1054 = vmul.f32 %v872, %v1046
    %v1055 = vmul.f32 %v951, %v1047
    %v1056 = vmul.f32 %v956, %v1048
    %v1057 = vmul.f32 %v1035, %v1049
    %v1058 = vmul.f32 %v1040, %v1050
    %1059 = vst.msk [vmem:[#allocation2] sm:$0xff] %vm304, %v1051
    %1061 = vrot.lane.b32.xlu0 %v1052, 8
    %v1062 = vpop.permute.xlu0 %1061
    %vm1064 = vcmask 130112
    %1065 = vst.msk [vmem:[#allocation2] sm:$0xff] %vm1064, %v1062
    %1067 = vrot.lane.b32.xlu0 %v1053, 16
    %v1068 = vpop.permute.xlu0 %1067
    %vm1070 = vcmask 195712
    %1071 = vst.msk [vmem:[#allocation2] sm:$0xff] %vm1070, %v1068
    %1073 = vrot.lane.b32.xlu0 %v1054, 24
    %v1074 = vpop.permute.xlu0 %1073
    %vm1076 = vcmask 261312
    %1077 = vst.msk [vmem:[#allocation2] sm:$0xff] %vm1076, %v1074
    %1078 = vst.msk [vmem:[#allocation2 + $0x8] sm:$0xff] %vm304, %v1055
    %1080 = vrot.lane.b32.xlu0 %v1056, 8
    %v1081 = vpop.permute.xlu0 %1080
    %1083 = vst.msk [vmem:[#allocation2 + $0x8] sm:$0xff] %vm1064, %v1081
    %1085 = vrot.lane.b32.xlu0 %v1057, 16
    %v1086 = vpop.permute.xlu0 %1085
    %1088 = vst.msk [vmem:[#allocation2 + $0x8] sm:$0xff] %vm1070, %v1086
    %1090 = vrot.lane.b32.xlu0 %v1058, 24
    %v1091 = vpop.permute.xlu0 %1090
    %1093 = vst.msk [vmem:[#allocation2 + $0x8] sm:$0xff] %vm1076, %v1091
    %v1094 = vld [vmem:[#allocation2] sm:$0xff]
    %v1095 = vld [vmem:[#allocation2 + $0x8] sm:$0xff]
    %v1096 = vld [vmem:[#allocation12] sm:$0xff]
    %v1097 = vld [vmem:[#allocation12 + $0x8] sm:$0xff]
    %v1098 = vld [vmem:[#allocation12 + $0x10] sm:$0xff]
    %v1099 = vld [vmem:[#allocation12 + $0x18] sm:$0xff]
    %v1100 = vld [vmem:[%s8] sm:$0x1]
    %v1102 = vlaneseq
    %v1103 = vshrl.u32 %v1102, 7
    %v1104 = vsub.s32 0, %v1103
    %v1105 = vrot.slane %v1100, %v1104
    %v1108 = vsel %vm134, %v1094, 0
    %v1111 = vsel %vm134, %v1095, 0
    %1113 = vmatprep.subr.mxu0 0.0
    %1114 = vmatpush1.msra.mxu0 %v1096
    %1115 = vmatprep.subr.mxu0 0.0
    %1116 = vmatpush1.msra.mxu0 %v1097
    %1117 = vmatprep.subr.mxu0 0.0
    %1118 = vmatpush1.msra.mxu0 %v1098
    %1119 = vmatprep.subr.mxu0 0.0
    %1120 = vmatpush1.msra.mxu0 %v1099
    %1121 = vmatprep.subr.mxu0 0.0
    %1122 = vmatpush1.msra.mxu0 0.0
    %1123 = vmatprep.subr.mxu0 0.0
    %1124 = vmatpush1.msra.mxu0 0.0
    %1125 = vmatprep.subr.mxu0 0.0
    %1126 = vmatpush1.msra.mxu0 0.0
    %1127 = vmatprep.subr.mxu0 0.0
    %1128 = vmatpush1.msra.mxu0 0.0
    %1129 = vmatprep.subr.mxu0 0.0
    %1130 = vmatpush1.msra.mxu0 0.0
    %1131 = vmatprep.subr.mxu0 0.0
    %1132 = vmatpush1.msra.mxu0 0.0
    %1133 = vmatprep.subr.mxu0 0.0
    %1134 = vmatpush1.msra.mxu0 0.0
    %1135 = vmatprep.subr.mxu0 0.0
    %1136 = vmatpush1.msra.mxu0 0.0
    %1137 = vmatprep.subr.mxu0 0.0
    %1138 = vmatpush1.msra.mxu0 0.0
    %1139 = vmatprep.subr.mxu0 0.0
    %1140 = vmatpush1.msra.mxu0 0.0
    %1141 = vmatprep.subr.mxu0 0.0
    %1142 = vmatpush1.msra.mxu0 0.0
    %1143 = vmatprep.subr.mxu0 0.0
    %1144 = vmatpush1.msra.mxu0 0.0
    %1145 = vmatprep.subr.mxu0 0.0
    %1146 = vmatpush1.msra.mxu0 0.0
    %1147 = vmatprep.subr.mxu0 0.0
    %1148 = vmatpush1.msra.mxu0 0.0
    %1149 = vmatprep.subr.mxu0 0.0
    %1150 = vmatpush1.msra.mxu0 0.0
    %1151 = vmatprep.subr.mxu0 0.0
    %1152 = vmatpush1.msra.mxu0 0.0
    %1153 = vmatprep.subr.mxu0 0.0
    %1154 = vmatpush1.msra.mxu0 0.0
    %1155 = vmatprep.subr.mxu0 0.0
    %1156 = vmatpush1.msra.mxu0 0.0
    %1157 = vmatprep.subr.mxu0 0.0
    %1158 = vmatpush1.msra.mxu0 0.0
    %1159 = vmatprep.subr.mxu0 0.0
    %1160 = vmatpush1.msra.mxu0 0.0
    %1161 = vmatprep.subr.mxu0 0.0
    %1162 = vmatpush1.msra.mxu0 0.0
    %1163 = vmatprep.subr.mxu0 0.0
    %1164 = vmatpush1.msra.mxu0 0.0
    %1165 = vmatprep.subr.mxu0 0.0
    %1166 = vmatpush1.msra.mxu0 0.0
    %1167 = vmatprep.subr.mxu0 0.0
    %1168 = vmatpush1.msra.mxu0 0.0
    %1169 = vmatprep.subr.mxu0 0.0
    %1170 = vmatpush1.msra.mxu0 0.0
    %1171 = vmatprep.subr.mxu0 0.0
    %1172 = vmatpush1.msra.mxu0 0.0
    %1173 = vmatprep.subr.mxu0 0.0
    %1174 = vmatpush1.msra.mxu0 0.0
    %1175 = vmatprep.subr.mxu0 0.0
    %1176 = vmatpush1.msra.mxu0 0.0
    %1177 = vmatprep.mubr.f32.mxu0 0.0
    %1178 = vmatmul.mubr.f32.gmra.mrb[0].mxu0 %v1108
    %v1179 = vpop.f32.mrb[0].mxu0
    %v1180 = vadd.f32 %v1105, %v1179
    %v1181 = vpop.f32.mrb[0].mxu0
    %1182 = vmatprep.mubr.f32.mxu0 0.0
    %1183 = vmatmul.mubr.f32.gmra.mrb[0].mxu0 %v1111
    %v1184 = vpop.f32.mrb[0].mxu0
    %v1185 = vadd.f32 %v1105, %v1184
    %v1186 = vpop.f32.mrb[0].mxu0
    %1187 = vdwg.mxu0
    %v1188 = vadd.f32 %v1180, %v121
    %v1189 = vadd.f32 %v1185, %v122
    %v1190 = vsel %vm134, %v1188, 0.0
    %1191 = vadd.xlane.f32.xlu0 %v1190
    %v1192 = vpop.xlane.xlu0 %1191
    %v1193 = vsel %vm134, %v1189, 0.0
    %1194 = vadd.xlane.f32.xlu0 %v1193
    %v1195 = vpop.xlane.xlu0 %1194
    %v1196 = vrcp.pop 32.0
    %v1197 = vmul.f32 %v1192, %v1196
    %v1198 = vmul.f32 %v1195, %v1196
    %v1199 = vsub.f32 %v1188, %v1197
    %v1200 = vsub.f32 %v1189, %v1198
    %v1201 = vmul.f32 %v1199, %v1199
    %v1202 = vmul.f32 %v1200, %v1200
    %v1203 = vsel %vm134, %v1201, 0.0
    %1204 = vadd.xlane.f32.xlu0 %v1203
    %v1205 = vpop.xlane.xlu0 %1204
    %v1206 = vsel %vm134, %v1202, 0.0
    %1207 = vadd.xlane.f32.xlu0 %v1206
    %v1208 = vpop.xlane.xlu0 %1207
    %v1209 = vmul.f32 %v1205, %v1196
    %v1210 = vmul.f32 %v1208, %v1196
    %v1211 = vadd.f32 %v1209, 1e-12
    %v1212 = vadd.f32 %v1210, 1e-12
    %v1213 = vrsqrt.pop %v1211
    %v1214 = vrsqrt.pop %v1212
    %v1215 = vmul.f32 %v1199, %v1213
    %v1216 = vmul.f32 %v1200, %v1214
    %v1217 = vld [vmem:[%s9] sm:$0x1]
    %v1219 = vlaneseq
    %v1220 = vshrl.u32 %v1219, 7
    %v1221 = vsub.s32 0, %v1220
    %v1222 = vrot.slane %v1217, %v1221
    %v1224 = vmul.f32 %v1215, %v1222
    %v1225 = vmul.f32 %v1216, %v1222
    %v1226 = vld [vmem:[%s10] sm:$0x1]
    %v1228 = vlaneseq
    %v1229 = vshrl.u32 %v1228, 7
    %v1230 = vsub.s32 0, %v1229
    %v1231 = vrot.slane %v1226, %v1230
    %v1233 = vadd.f32 %v1224, %v1231
    %v1234 = vadd.f32 %v1225, %v1231
    %1235 = vst.msk [vmem:[#allocation14] sm:$0xff] %vm134, %v1233
    %1236 = vst.msk [vmem:[#allocation14 + $0x8] sm:$0xff] %vm134, %v1234
    // Predicated region
    $region70: #{tpu_custom_call.1} parent=1 // pred_check
      _
    $region71: #{tpu_custom_call.1} parent=1 // pred_check_branch
      %1238 = sbr.rel (0) target = $region73
    $region72: #{tpu_custom_call.1} parent=1 // pred_region
      %s1240 = ssub.s32 256, 256
      %1241 = vsyncadd [#allocation5], %s1240
      %s1242 = sshll.u32 [#allocation14], 4
      %s1243 = int_to_ptr.vmem [resolvable:$true] %s1242
      %1248 = dma.vmem_to_hbm [thread:$0]  %s1243, 256, %s11, [#allocation5], 128, 128, 8
    $region73: #{tpu_custom_call.1} parent=1 // pred_fallthru
      _
    // Predicated region
    $region74: #{tpu_custom_call.1} parent=1 // pred_check
      _
    $region75: #{tpu_custom_call.1} parent=1 // pred_check_branch
      %1250 = sbr.rel (0) target = $region77
    $region76: #{tpu_custom_call.1} parent=1 // pred_region
      %1251 = dma.done [#allocation5], 256
    $region77: #{tpu_custom_call.1} parent=1 // pred_fallthru
      _
    %1252 = vsyncpa [#allocation4], 1
    %1253 = vsyncpa [#allocation7], 1
    %1254 = vsyncpa [#allocation10], 1
    %1255 = vsyncpa [#allocation13], 1
    %1256 = vsyncpa [#allocation5], 1

</llo_original>
